<compile_context>
chip_gen: v6e
topology: v6e:2x2x1
jax: 0.10.0
libtpu: 0.0.40
codegen_flags: <defaults>
</compile_context>

<pallas_src>
import jax
import jax.numpy as jnp
import numpy as np
from jax import lax
from jax.experimental import pallas as pl
from jax.experimental.pallas import tpu as pltpu


def _softplus(x):
    # matches torch.nn.Softplus(beta=1, threshold=20)
    return jnp.where(x > 20.0, x, jnp.log(1.0 + jnp.exp(jnp.minimum(x, 20.0))))


def _silu(x):
    return x * (1.0 / (1.0 + jnp.exp(-x)))


def _make_kernel(S, B, GBP, D, N, HEAD):
    ND = N * D

    def kernel(x_ref, w_ref, misc_ref, out_ref, h_sc):
        x = x_ref[...]                                     # (S*GBP, D), time-major rows
        # LayerNorm -> normalized x_hat only; the affine (gamma, beta) is folded into
        # the weight slab / bias host-side (xn @ W + b == x_hat @ (gamma*W) + beta@W + b).
        mean = jnp.mean(x, axis=-1, keepdims=True)
        xc = x - mean
        var = jnp.mean(xc * xc, axis=-1, keepdims=True)
        xh = xc * lax.rsqrt(var + 1e-5)

        bias = misc_ref[:, 0:HEAD + 4 * ND]                # (1, HEAD + 4*ND)
        a_flat = misc_ref[:, HEAD + 4 * ND:HEAD + 5 * ND]  # (1, ND): lane n*D+d = A[d, n]

        # ONE MXU pass produces every per-row quantity (all blocks 128-lane aligned):
        #   [ z_pre | u*Dparam | pad | u tiled | delta_pre tiled | B expanded | C expanded ]
        big = jnp.dot(xh, w_ref[...], preferred_element_type=jnp.float32) + bias

        z_pre = big[:, 0:D]                                # (rows, D)
        udp = big[:, D:2 * D]                              # u * Dparam
        u_t = big[:, HEAD:HEAD + ND]                       # u[d]      at lane n*D+d
        delta_t = _softplus(big[:, HEAD + ND:HEAD + 2 * ND])
        b_exp = big[:, HEAD + 2 * ND:HEAD + 3 * ND]        # B[n]      at lane n*D+d
        c_exp = big[:, HEAD + 3 * ND:HEAD + 4 * ND]        # C[n]      at lane n*D+d

        # Everything state-independent is hoisted off the serial scan.
        dA = jnp.exp(delta_t * a_flat)                     # (rows, ND)
        duB = delta_t * u_t * b_exp                        # (rows, ND)
        dA3 = dA.reshape(S, GBP, ND)                       # leading-dim splits: layout-free
        duB3 = duB.reshape(S, GBP, ND)

        # Selective scan: the serial part is a single full-lane fma per step.
        h = jnp.zeros((GBP, ND), jnp.float32)
        for s in range(S):                                 # S small & static -> unrolled
            h = dA3[s] * h + duB3[s]
            h_sc[s] = h

        # Epilogue (all off the serial chain): y[., d] = sum_n h[., n*D+d]*C[., n] + u*Dparam
        hc = h_sc[...].reshape(S * GBP, ND) * c_exp
        r = hc
        width = ND
        while width > D:                                   # lane-halving tree reduce over N
            half = width // 2
            r = r[:, :half] + r[:, half:width]
            width = half
        y = r + udp                                        # (rows, D)
        z = _silu(z_pre)                                   # gate

        # Gated cross-stream combine (PyTorch: a+b+c+d+e+f, with e == f == ssm2*z0).
        y3 = y.reshape(S, GBP, D)
        z3 = z.reshape(S, GBP, D)
        y0, y1, y2 = y3[:, 0:B], y3[:, B:2 * B], y3[:, 2 * B:3 * B]
        g0, g1, g2 = z3[:, 0:B], z3[:, B:2 * B], z3[:, 2 * B:3 * B]
        res = y0 * (g1 + g2) + y1 * (g0 + g2) + 2.0 * y2 * g0          # (S, B, D)

        # Write the output directly in (B, S, D): no wrapper-side transpose needed.
        for b in range(B):
            out_ref[b] = res[:, b, :]

    return kernel


@jax.jit
def vim_block3_pallas(x, x_, x__, params):
    B, S, D = x.shape
    R = params["wdt"].shape[1]
    N = params["alog"].shape[1]
    ND = N * D
    assert params["alog"].shape[0] == D, "kernel assumes dim_inner == dim"
    assert x_.shape == x.shape and x__.shape == x.shape

    GB = 3 * B
    GBP = -(-GB // 8) * 8                  # pad (stream, batch) rows to a sublane multiple
    HEAD = -(-2 * D // 128) * 128          # [z_pre | u*Dparam] block padded to 128 lanes
    f32 = jnp.float32

    # ---- stack streams & batch, pad, go time-major: row = s*GBP + (g*B + b) ----
    # TODO(synk): this relayout (and the final output) could also be done in-kernel to
    # shave the surrounding fused op; under jit it is a single tiny fusion.
    xs = jnp.stack([x, x_, x__], axis=0).astype(f32).reshape(GB, S, D)
    if GBP > GB:
        xs = jnp.concatenate([xs, jnp.zeros((GBP - GB, S, D), f32)], axis=0)
    xflat = xs.transpose(1, 0, 2).reshape(S * GBP, D)

    # ---- fold the whole linear pipeline into ONE weight slab (trace-time jnp only) ----
    gamma = params["gamma"].astype(f32).reshape(D)
    beta = params["beta"].astype(f32).reshape(1, D)
    wp_t = params["wp"].T.astype(f32)                          # proj.weight^T        (D, D)
    bp = params["bp"].astype(f32).reshape(1, D)
    wc_t = params["wc"].T.astype(f32)                          # 1x1 conv == Linear   (D, D)
    bc = params["bc"].astype(f32).reshape(1, D)
    w_uc = wp_t @ wc_t                                         # proj -> conv         (D, D)
    b_uc = bp @ wc_t + bc
    wd_t = params["wd"].T.astype(f32)                          # deltaBC.weight^T (D, R+2N)
    w_dt = wd_t[:, :R] @ params["wdt"].T.astype(f32)           # delta -> dt_proj     (D, D)
    bdt = params["bdt"].astype(f32).reshape(1, D)
    w_delta = w_uc @ w_dt                                      # x_hat -> delta_pre   (D, D)
    b_delta = b_uc @ w_dt + bdt
    w_b = w_uc @ wd_t[:, R:R + N]                              # x_hat -> B           (D, N)
    b_b = b_uc @ wd_t[:, R:R + N]
    w_c = w_uc @ wd_t[:, R + N:R + 2 * N]                      # x_hat -> C           (D, N)
    b_c = b_uc @ wd_t[:, R + N:R + 2 * N]
    A = -jnp.exp(params["alog"].astype(f32))                   # (D, N)
    a_flat = A.T.reshape(1, ND)                                # lane n*D+d = A[d, n]
    dpar = params["dpar"].astype(f32).reshape(1, D)

    # Lane-packed layout: lane n*D+d == (state n, feature d).
    #   u / delta tiled across states -> jnp.tile ; B / C broadcast across features -> repeat.
    pad_w = jnp.zeros((D, HEAD - 2 * D), f32)
    pad_b = jnp.zeros((1, HEAD - 2 * D), f32)
    w_all = jnp.concatenate(
        [wp_t, w_uc * dpar, pad_w,
         jnp.tile(w_uc, (1, N)), jnp.tile(w_delta, (1, N)),
         jnp.repeat(w_b, D, axis=1), jnp.repeat(w_c, D, axis=1)], axis=1)   # (D, HEAD+4ND)
    b_all = jnp.concatenate(
        [bp, b_uc * dpar, pad_b,
         jnp.tile(b_uc, (1, N)), jnp.tile(b_delta, (1, N)),
         jnp.repeat(b_b, D, axis=1), jnp.repeat(b_c, D, axis=1)], axis=1)   # (1, HEAD+4ND)
    # fold the LayerNorm affine:  xn @ W + b == x_hat @ (gamma * W) + (beta @ W + b)
    b_all = b_all + beta @ w_all
    w_all = gamma[:, None] * w_all
    misc = jnp.concatenate([b_all, a_flat], axis=1)            # (1, HEAD + 5*ND)

    operands = [xflat, w_all, misc]                            # 3 DMAs total (was 13)

    def full_spec(shape):
        nd = len(shape)
        return pl.BlockSpec(shape, lambda i, _nd=nd: (0,) * _nd)

    out = pl.pallas_call(
        _make_kernel(S, B, GBP, D, N, HEAD),
        out_shape=jax.ShapeDtypeStruct((B, S, D), f32),
        grid_spec=pltpu.PrefetchScalarGridSpec(
            num_scalar_prefetch=0,
            grid=(1,),                                         # whole problem fits VMEM
            in_specs=[full_spec(op.shape) for op in operands],
            out_specs=full_spec((B, S, D)),
            scratch_shapes=[pltpu.VMEM((S, GBP, ND), f32)],    # scan-state history
        ),
        compiler_params=pltpu.CompilerParams(dimension_semantics=("arbitrary",)),
    )(*operands)
    return out


def reference(x, x_, x__, p):
    """Pure-JAX reference mirroring the PyTorch forward (unfused weights)."""
    D = x.shape[-1]
    R = p["wdt"].shape[1]
    N = p["alog"].shape[1]

    def stream(xb):  # (B, S, D)
        mean = jnp.mean(xb, -1, keepdims=True)
        var = jnp.mean((xb - mean) ** 2, -1, keepdims=True)
        xn = (xb - mean) / jnp.sqrt(var + 1e-5) * p["gamma"] + p["beta"]
        z1 = xn @ p["wp"].T + p["bp"]
        u = z1 @ p["wc"].T + p["bc"]                     # 1x1 conv == per-token Linear
        dBC = u @ p["wd"].T
        delta = jax.nn.softplus(dBC[..., :R] @ p["wdt"].T + p["bdt"])
        Bm = dBC[..., R:R + N]
        Cm = dBC[..., R + N:R + 2 * N]
        A = -jnp.exp(p["alog"])
        dA = jnp.exp(delta[..., None] * A)
        dBu = delta[..., None] * Bm[..., None, :] * u[..., None]
        Bb, S, _ = xb.shape
        h = jnp.zeros((Bb, D, N), jnp.float32)
        ys = []
        for i in range(S):
            h = dA[:, i] * h + dBu[:, i]
            ys.append(jnp.einsum("bdn,bn->bd", h, Cm[:, i]))
        y = jnp.stack(ys, axis=1) + u * p["dpar"]
        z = jax.nn.silu(z1)
        return y, z

    y0, z0 = stream(x)
    y1, z1 = stream(x_)
    y2, z2 = stream(x__)
    # a + b + c + d + e + f from the PyTorch forward (note e == f == ssm2 * z0).
    return y0 * (z1 + z2) + y1 * (z0 + z2) + 2.0 * y2 * z0


if __name__ == "__main__":
    # module hyperparams (heads is unused by the forward pass)
    dim, heads, dt_rank, dim_inner, d_state = 32, 8, 8, 32, 8
    B, S = 2, 8

    key = jax.random.PRNGKey(0)
    ks = jax.random.split(key, 13)
    scale = 0.1

    x = jax.random.normal(ks[0], (B, S, dim), jnp.float32)
    x_ = jax.random.normal(ks[1], (B, S, dim), jnp.float32)
    x__ = jax.random.normal(ks[2], (B, S, dim), jnp.float32)

    params = dict(
        gamma=1.0 + 0.1 * jax.random.normal(ks[10], (dim,), jnp.float32),   # exercise LN fold
        beta=0.05 * jax.random.normal(ks[11], (dim,), jnp.float32),
        wp=jax.random.normal(ks[3], (dim, dim), jnp.float32) * scale,        # proj.weight (out, in)
        bp=jax.random.normal(ks[4], (dim,), jnp.float32) * scale,
        wc=jax.random.normal(ks[5], (dim, dim), jnp.float32) * scale,        # conv1d weight (out, in, 1) squeezed
        bc=jax.random.normal(ks[6], (dim,), jnp.float32) * scale,
        wd=jax.random.normal(ks[7], (dt_rank + 2 * d_state, dim), jnp.float32) * scale,  # deltaBC (no bias)
        wdt=jax.random.normal(ks[8], (dim_inner, dt_rank), jnp.float32) * scale,
        bdt=jax.random.normal(ks[9], (dim_inner,), jnp.float32) * scale,
        alog=jnp.log(jnp.tile(jnp.arange(1, d_state + 1, dtype=jnp.float32)[None, :],
                              (dim_inner, 1))),                              # A_log init
        dpar=1.0 + 0.1 * jax.random.normal(ks[12], (dim_inner,), jnp.float32),  # exercise D fold
    )

    out = vim_block3_pallas(x, x_, x__, params)
    out = jax.block_until_ready(out)

    ref = reference(x, x_, x__, params)
    assert out.shape == (B, S, dim)
    np.testing.assert_allclose(np.asarray(out), np.asarray(ref), rtol=1e-4, atol=1e-4)
    print("KERNEL_OK")
</pallas_src>

<mosaic_0001>
module attributes {stable_mosaic.version = 11 : i64} {
  func.func @kernel(%arg0: i32, %arg1: memref<64x32xf32, #tpu.memory_space<vmem>>, %arg2: memref<32x1152xf32, #tpu.memory_space<vmem>>, %arg3: memref<1x1408xf32, #tpu.memory_space<vmem>>, %arg4: memref<2x8x32xf32, #tpu.memory_space<vmem>>, %arg5: memref<8x8x256xf32, #tpu.memory_space<vmem>>) attributes {dimension_semantics = [#tpu.dimension_semantics<arbitrary>], iteration_bounds = array<i64: 1>, scalar_prefetch = 0 : i64, scratch_operands = 1 : i64, tpu.core_type = #tpu.core_type<tc>, window_params = [{pipeline_mode = #tpu.pipeline_mode<synchronous>, transform_indices = @transform_0, window_bounds = array<i64: 64, 32>}, {pipeline_mode = #tpu.pipeline_mode<synchronous>, transform_indices = @transform_1, window_bounds = array<i64: 32, 1152>}, {pipeline_mode = #tpu.pipeline_mode<synchronous>, transform_indices = @transform_2, window_bounds = array<i64: 1, 1408>}, {pipeline_mode = #tpu.pipeline_mode<synchronous>, transform_indices = @transform_3, window_bounds = array<i64: 2, 8, 32>}]} {
    %c0 = arith.constant 0 : index
    %c0_0 = arith.constant 0 : index
    %0 = vector.load %arg1[%c0, %c0_0] : memref<64x32xf32, #tpu.memory_space<vmem>>, vector<64x32xf32>
    %cst = arith.constant dense<0.000000e+00> : vector<64xf32>
    %1 = vector.multi_reduction <add>, %0, %cst [1] : vector<64x32xf32> to vector<64xf32>
    %2 = vector.shape_cast %1 : vector<64xf32> to vector<64x1xf32>
    %cst_1 = arith.constant 3.200000e+01 : f32
    %3 = vector.broadcast %cst_1 : f32 to vector<64x1xf32>
    %4 = arith.divf %2, %3 : vector<64x1xf32>
    %5 = vector.broadcast %4 : vector<64x1xf32> to vector<64x32xf32>
    %6 = arith.subf %0, %5 : vector<64x32xf32>
    %7 = arith.mulf %6, %6 : vector<64x32xf32>
    %cst_2 = arith.constant dense<0.000000e+00> : vector<64xf32>
    %8 = vector.multi_reduction <add>, %7, %cst_2 [1] : vector<64x32xf32> to vector<64xf32>
    %9 = vector.shape_cast %8 : vector<64xf32> to vector<64x1xf32>
    %cst_3 = arith.constant 3.200000e+01 : f32
    %10 = vector.broadcast %cst_3 : f32 to vector<64x1xf32>
    %11 = arith.divf %9, %10 : vector<64x1xf32>
    %cst_4 = arith.constant 9.99999974E-6 : f32
    %12 = vector.broadcast %cst_4 : f32 to vector<64x1xf32>
    %13 = arith.addf %11, %12 : vector<64x1xf32>
    %14 = math.rsqrt %13 : vector<64x1xf32>
    %15 = vector.broadcast %14 : vector<64x1xf32> to vector<64x32xf32>
    %16 = arith.mulf %6, %15 : vector<64x32xf32>
    %c0_5 = arith.constant 0 : index
    %c0_6 = arith.constant 0 : index
    %17 = vector.load %arg3[%c0_5, %c0_6] : memref<1x1408xf32, #tpu.memory_space<vmem>>, vector<1x1152xf32>
    %c0_7 = arith.constant 0 : index
    %c1152 = arith.constant 1152 : index
    %18 = vector.load %arg3[%c0_7, %c1152] : memref<1x1408xf32, #tpu.memory_space<vmem>>, vector<1x256xf32>
    %c0_8 = arith.constant 0 : index
    %c0_9 = arith.constant 0 : index
    %19 = vector.load %arg2[%c0_8, %c0_9] : memref<32x1152xf32, #tpu.memory_space<vmem>>, vector<32x1152xf32>
    %cst_10 = arith.constant dense<0.000000e+00> : vector<64x1152xf32>
    %20 = tpu.matmul %16, %19, %cst_10 {dimension_numbers = #tpu.dot_dimension_numbers<[1], [0], [0], [1], [0, 0, 1, 1], [], []>} : vector<64x32xf32>, vector<32x1152xf32>, vector<64x1152xf32> -> vector<64x1152xf32>
    %21 = vector.broadcast %17 : vector<1x1152xf32> to vector<64x1152xf32>
    %22 = arith.addf %20, %21 : vector<64x1152xf32>
    %23 = vector.extract_strided_slice %22 {offsets = [0, 0], sizes = [64, 32], strides = [1, 1]} : vector<64x1152xf32> to vector<64x32xf32>
    %24 = vector.extract_strided_slice %22 {offsets = [0, 32], sizes = [64, 32], strides = [1, 1]} : vector<64x1152xf32> to vector<64x32xf32>
    %25 = vector.extract_strided_slice %22 {offsets = [0, 128], sizes = [64, 256], strides = [1, 1]} : vector<64x1152xf32> to vector<64x256xf32>
    %26 = vector.extract_strided_slice %22 {offsets = [0, 384], sizes = [64, 256], strides = [1, 1]} : vector<64x1152xf32> to vector<64x256xf32>
    %cst_11 = arith.constant 2.000000e+01 : f32
    %27 = vector.broadcast %cst_11 : f32 to vector<64x256xf32>
    %28 = arith.cmpf ogt, %26, %27 : vector<64x256xf32>
    %cst_12 = arith.constant 2.000000e+01 : f32
    %29 = vector.broadcast %cst_12 : f32 to vector<64x256xf32>
    %30 = arith.minimumf %26, %29 : vector<64x256xf32>
    %31 = math.exp %30 : vector<64x256xf32>
    %cst_13 = arith.constant 1.000000e+00 : f32
    %32 = vector.broadcast %cst_13 : f32 to vector<64x256xf32>
    %33 = arith.addf %32, %31 : vector<64x256xf32>
    %34 = math.log %33 : vector<64x256xf32>
    %35 = arith.select %28, %26, %34 : vector<64x256xi1>, vector<64x256xf32>
    %36 = vector.extract_strided_slice %22 {offsets = [0, 640], sizes = [64, 256], strides = [1, 1]} : vector<64x1152xf32> to vector<64x256xf32>
    %37 = vector.extract_strided_slice %22 {offsets = [0, 896], sizes = [64, 256], strides = [1, 1]} : vector<64x1152xf32> to vector<64x256xf32>
    %38 = vector.broadcast %18 : vector<1x256xf32> to vector<64x256xf32>
    %39 = arith.mulf %35, %38 : vector<64x256xf32>
    %40 = math.exp %39 : vector<64x256xf32>
    %41 = arith.mulf %35, %25 : vector<64x256xf32>
    %42 = arith.mulf %41, %36 : vector<64x256xf32>
    %43 = vector.shape_cast %40 : vector<64x256xf32> to vector<8x8x256xf32>
    %44 = vector.shape_cast %42 : vector<64x256xf32> to vector<8x8x256xf32>
    %cst_14 = arith.constant 0.000000e+00 : f32
    %45 = vector.broadcast %cst_14 : f32 to vector<8x256xf32>
    %46 = vector.extract_strided_slice %43 {offsets = [0, 0, 0], sizes = [1, 8, 256], strides = [1, 1, 1]} : vector<8x8x256xf32> to vector<1x8x256xf32>
    %47 = vector.shape_cast %46 : vector<1x8x256xf32> to vector<8x256xf32>
    %48 = arith.mulf %47, %45 : vector<8x256xf32>
    %49 = vector.extract_strided_slice %44 {offsets = [0, 0, 0], sizes = [1, 8, 256], strides = [1, 1, 1]} : vector<8x8x256xf32> to vector<1x8x256xf32>
    %50 = vector.shape_cast %49 : vector<1x8x256xf32> to vector<8x256xf32>
    %51 = arith.addf %48, %50 : vector<8x256xf32>
    %c0_15 = arith.constant 0 : index
    %c0_16 = arith.constant 0 : index
    %c0_17 = arith.constant 0 : index
    %52 = vector.load %arg5[%c0_15, %c0_16, %c0_17] : memref<8x8x256xf32, #tpu.memory_space<vmem>>, vector<1x8x256xf32>
    %53 = vector.shape_cast %52 : vector<1x8x256xf32> to vector<8x256xf32>
    %54 = vector.shape_cast %51 : vector<8x256xf32> to vector<1x8x256xf32>
    tpu.vector_store %arg5[%c0_15, %c0_16, %c0_17], %54 {strides = array<i32>} : memref<8x8x256xf32, #tpu.memory_space<vmem>>, vector<1x8x256xf32>,
    %55 = vector.extract_strided_slice %43 {offsets = [1, 0, 0], sizes = [1, 8, 256], strides = [1, 1, 1]} : vector<8x8x256xf32> to vector<1x8x256xf32>
    %56 = vector.shape_cast %55 : vector<1x8x256xf32> to vector<8x256xf32>
    %57 = arith.mulf %56, %51 : vector<8x256xf32>
    %58 = vector.extract_strided_slice %44 {offsets = [1, 0, 0], sizes = [1, 8, 256], strides = [1, 1, 1]} : vector<8x8x256xf32> to vector<1x8x256xf32>
    %59 = vector.shape_cast %58 : vector<1x8x256xf32> to vector<8x256xf32>
    %60 = arith.addf %57, %59 : vector<8x256xf32>
    %c1 = arith.constant 1 : index
    %c0_18 = arith.constant 0 : index
    %c0_19 = arith.constant 0 : index
    %61 = vector.load %arg5[%c1, %c0_18, %c0_19] : memref<8x8x256xf32, #tpu.memory_space<vmem>>, vector<1x8x256xf32>
    %62 = vector.shape_cast %61 : vector<1x8x256xf32> to vector<8x256xf32>
    %63 = vector.shape_cast %60 : vector<8x256xf32> to vector<1x8x256xf32>
    tpu.vector_store %arg5[%c1, %c0_18, %c0_19], %63 {strides = array<i32>} : memref<8x8x256xf32, #tpu.memory_space<vmem>>, vector<1x8x256xf32>,
    %64 = vector.extract_strided_slice %43 {offsets = [2, 0, 0], sizes = [1, 8, 256], strides = [1, 1, 1]} : vector<8x8x256xf32> to vector<1x8x256xf32>
    %65 = vector.shape_cast %64 : vector<1x8x256xf32> to vector<8x256xf32>
    %66 = arith.mulf %65, %60 : vector<8x256xf32>
    %67 = vector.extract_strided_slice %44 {offsets = [2, 0, 0], sizes = [1, 8, 256], strides = [1, 1, 1]} : vector<8x8x256xf32> to vector<1x8x256xf32>
    %68 = vector.shape_cast %67 : vector<1x8x256xf32> to vector<8x256xf32>
    %69 = arith.addf %66, %68 : vector<8x256xf32>
    %c2 = arith.constant 2 : index
    %c0_20 = arith.constant 0 : index
    %c0_21 = arith.constant 0 : index
    %70 = vector.load %arg5[%c2, %c0_20, %c0_21] : memref<8x8x256xf32, #tpu.memory_space<vmem>>, vector<1x8x256xf32>
    %71 = vector.shape_cast %70 : vector<1x8x256xf32> to vector<8x256xf32>
    %72 = vector.shape_cast %69 : vector<8x256xf32> to vector<1x8x256xf32>
    tpu.vector_store %arg5[%c2, %c0_20, %c0_21], %72 {strides = array<i32>} : memref<8x8x256xf32, #tpu.memory_space<vmem>>, vector<1x8x256xf32>,
    %73 = vector.extract_strided_slice %43 {offsets = [3, 0, 0], sizes = [1, 8, 256], strides = [1, 1, 1]} : vector<8x8x256xf32> to vector<1x8x256xf32>
    %74 = vector.shape_cast %73 : vector<1x8x256xf32> to vector<8x256xf32>
    %75 = arith.mulf %74, %69 : vector<8x256xf32>
    %76 = vector.extract_strided_slice %44 {offsets = [3, 0, 0], sizes = [1, 8, 256], strides = [1, 1, 1]} : vector<8x8x256xf32> to vector<1x8x256xf32>
    %77 = vector.shape_cast %76 : vector<1x8x256xf32> to vector<8x256xf32>
    %78 = arith.addf %75, %77 : vector<8x256xf32>
    %c3 = arith.constant 3 : index
    %c0_22 = arith.constant 0 : index
    %c0_23 = arith.constant 0 : index
    %79 = vector.load %arg5[%c3, %c0_22, %c0_23] : memref<8x8x256xf32, #tpu.memory_space<vmem>>, vector<1x8x256xf32>
    %80 = vector.shape_cast %79 : vector<1x8x256xf32> to vector<8x256xf32>
    %81 = vector.shape_cast %78 : vector<8x256xf32> to vector<1x8x256xf32>
    tpu.vector_store %arg5[%c3, %c0_22, %c0_23], %81 {strides = array<i32>} : memref<8x8x256xf32, #tpu.memory_space<vmem>>, vector<1x8x256xf32>,
    %82 = vector.extract_strided_slice %43 {offsets = [4, 0, 0], sizes = [1, 8, 256], strides = [1, 1, 1]} : vector<8x8x256xf32> to vector<1x8x256xf32>
    %83 = vector.shape_cast %82 : vector<1x8x256xf32> to vector<8x256xf32>
    %84 = arith.mulf %83, %78 : vector<8x256xf32>
    %85 = vector.extract_strided_slice %44 {offsets = [4, 0, 0], sizes = [1, 8, 256], strides = [1, 1, 1]} : vector<8x8x256xf32> to vector<1x8x256xf32>
    %86 = vector.shape_cast %85 : vector<1x8x256xf32> to vector<8x256xf32>
    %87 = arith.addf %84, %86 : vector<8x256xf32>
    %c4 = arith.constant 4 : index
    %c0_24 = arith.constant 0 : index
    %c0_25 = arith.constant 0 : index
    %88 = vector.load %arg5[%c4, %c0_24, %c0_25] : memref<8x8x256xf32, #tpu.memory_space<vmem>>, vector<1x8x256xf32>
    %89 = vector.shape_cast %88 : vector<1x8x256xf32> to vector<8x256xf32>
    %90 = vector.shape_cast %87 : vector<8x256xf32> to vector<1x8x256xf32>
    tpu.vector_store %arg5[%c4, %c0_24, %c0_25], %90 {strides = array<i32>} : memref<8x8x256xf32, #tpu.memory_space<vmem>>, vector<1x8x256xf32>,
    %91 = vector.extract_strided_slice %43 {offsets = [5, 0, 0], sizes = [1, 8, 256], strides = [1, 1, 1]} : vector<8x8x256xf32> to vector<1x8x256xf32>
    %92 = vector.shape_cast %91 : vector<1x8x256xf32> to vector<8x256xf32>
    %93 = arith.mulf %92, %87 : vector<8x256xf32>
    %94 = vector.extract_strided_slice %44 {offsets = [5, 0, 0], sizes = [1, 8, 256], strides = [1, 1, 1]} : vector<8x8x256xf32> to vector<1x8x256xf32>
    %95 = vector.shape_cast %94 : vector<1x8x256xf32> to vector<8x256xf32>
    %96 = arith.addf %93, %95 : vector<8x256xf32>
    %c5 = arith.constant 5 : index
    %c0_26 = arith.constant 0 : index
    %c0_27 = arith.constant 0 : index
    %97 = vector.load %arg5[%c5, %c0_26, %c0_27] : memref<8x8x256xf32, #tpu.memory_space<vmem>>, vector<1x8x256xf32>
    %98 = vector.shape_cast %97 : vector<1x8x256xf32> to vector<8x256xf32>
    %99 = vector.shape_cast %96 : vector<8x256xf32> to vector<1x8x256xf32>
    tpu.vector_store %arg5[%c5, %c0_26, %c0_27], %99 {strides = array<i32>} : memref<8x8x256xf32, #tpu.memory_space<vmem>>, vector<1x8x256xf32>,
    %100 = vector.extract_strided_slice %43 {offsets = [6, 0, 0], sizes = [1, 8, 256], strides = [1, 1, 1]} : vector<8x8x256xf32> to vector<1x8x256xf32>
    %101 = vector.shape_cast %100 : vector<1x8x256xf32> to vector<8x256xf32>
    %102 = arith.mulf %101, %96 : vector<8x256xf32>
    %103 = vector.extract_strided_slice %44 {offsets = [6, 0, 0], sizes = [1, 8, 256], strides = [1, 1, 1]} : vector<8x8x256xf32> to vector<1x8x256xf32>
    %104 = vector.shape_cast %103 : vector<1x8x256xf32> to vector<8x256xf32>
    %105 = arith.addf %102, %104 : vector<8x256xf32>
    %c6 = arith.constant 6 : index
    %c0_28 = arith.constant 0 : index
    %c0_29 = arith.constant 0 : index
    %106 = vector.load %arg5[%c6, %c0_28, %c0_29] : memref<8x8x256xf32, #tpu.memory_space<vmem>>, vector<1x8x256xf32>
    %107 = vector.shape_cast %106 : vector<1x8x256xf32> to vector<8x256xf32>
    %108 = vector.shape_cast %105 : vector<8x256xf32> to vector<1x8x256xf32>
    tpu.vector_store %arg5[%c6, %c0_28, %c0_29], %108 {strides = array<i32>} : memref<8x8x256xf32, #tpu.memory_space<vmem>>, vector<1x8x256xf32>,
    %109 = vector.extract_strided_slice %43 {offsets = [7, 0, 0], sizes = [1, 8, 256], strides = [1, 1, 1]} : vector<8x8x256xf32> to vector<1x8x256xf32>
    %110 = vector.shape_cast %109 : vector<1x8x256xf32> to vector<8x256xf32>
    %111 = arith.mulf %110, %105 : vector<8x256xf32>
    %112 = vector.extract_strided_slice %44 {offsets = [7, 0, 0], sizes = [1, 8, 256], strides = [1, 1, 1]} : vector<8x8x256xf32> to vector<1x8x256xf32>
    %113 = vector.shape_cast %112 : vector<1x8x256xf32> to vector<8x256xf32>
    %114 = arith.addf %111, %113 : vector<8x256xf32>
    %c7 = arith.constant 7 : index
    %c0_30 = arith.constant 0 : index
    %c0_31 = arith.constant 0 : index
    %115 = vector.load %arg5[%c7, %c0_30, %c0_31] : memref<8x8x256xf32, #tpu.memory_space<vmem>>, vector<1x8x256xf32>
    %116 = vector.shape_cast %115 : vector<1x8x256xf32> to vector<8x256xf32>
    %117 = vector.shape_cast %114 : vector<8x256xf32> to vector<1x8x256xf32>
    tpu.vector_store %arg5[%c7, %c0_30, %c0_31], %117 {strides = array<i32>} : memref<8x8x256xf32, #tpu.memory_space<vmem>>, vector<1x8x256xf32>,
    %c0_32 = arith.constant 0 : index
    %c0_33 = arith.constant 0 : index
    %c0_34 = arith.constant 0 : index
    %118 = vector.load %arg5[%c0_32, %c0_33, %c0_34] : memref<8x8x256xf32, #tpu.memory_space<vmem>>, vector<8x8x256xf32>
    %119 = vector.shape_cast %118 : vector<8x8x256xf32> to vector<64x256xf32>
    %120 = arith.mulf %119, %37 : vector<64x256xf32>
    %121 = vector.extract_strided_slice %120 {offsets = [0, 0], sizes = [64, 128], strides = [1, 1]} : vector<64x256xf32> to vector<64x128xf32>
    %122 = vector.extract_strided_slice %120 {offsets = [0, 128], sizes = [64, 128], strides = [1, 1]} : vector<64x256xf32> to vector<64x128xf32>
    %123 = arith.addf %121, %122 : vector<64x128xf32>
    %124 = vector.extract_strided_slice %123 {offsets = [0, 0], sizes = [64, 64], strides = [1, 1]} : vector<64x128xf32> to vector<64x64xf32>
    %125 = vector.extract_strided_slice %123 {offsets = [0, 64], sizes = [64, 64], strides = [1, 1]} : vector<64x128xf32> to vector<64x64xf32>
    %126 = arith.addf %124, %125 : vector<64x64xf32>
    %127 = vector.extract_strided_slice %126 {offsets = [0, 0], sizes = [64, 32], strides = [1, 1]} : vector<64x64xf32> to vector<64x32xf32>
    %128 = vector.extract_strided_slice %126 {offsets = [0, 32], sizes = [64, 32], strides = [1, 1]} : vector<64x64xf32> to vector<64x32xf32>
    %129 = arith.addf %127, %128 : vector<64x32xf32>
    %130 = arith.addf %129, %24 : vector<64x32xf32>
    %cst_35 = arith.constant 0.000000e+00 : f32
    %131 = vector.broadcast %cst_35 : f32 to vector<64x32xf32>
    %132 = arith.subf %131, %23 : vector<64x32xf32>
    %133 = math.exp %132 : vector<64x32xf32>
    %cst_36 = arith.constant 1.000000e+00 : f32
    %134 = vector.broadcast %cst_36 : f32 to vector<64x32xf32>
    %135 = arith.addf %134, %133 : vector<64x32xf32>
    %cst_37 = arith.constant 1.000000e+00 : f32
    %136 = vector.broadcast %cst_37 : f32 to vector<64x32xf32>
    %137 = arith.divf %136, %135 : vector<64x32xf32>
    %138 = arith.mulf %23, %137 : vector<64x32xf32>
    %139 = vector.shape_cast %130 : vector<64x32xf32> to vector<8x8x32xf32>
    %140 = vector.shape_cast %138 : vector<64x32xf32> to vector<8x8x32xf32>
    %141 = vector.extract_strided_slice %139 {offsets = [0, 0, 0], sizes = [8, 2, 32], strides = [1, 1, 1]} : vector<8x8x32xf32> to vector<8x2x32xf32>
    %142 = vector.extract_strided_slice %139 {offsets = [0, 2, 0], sizes = [8, 2, 32], strides = [1, 1, 1]} : vector<8x8x32xf32> to vector<8x2x32xf32>
    %143 = vector.extract_strided_slice %139 {offsets = [0, 4, 0], sizes = [8, 2, 32], strides = [1, 1, 1]} : vector<8x8x32xf32> to vector<8x2x32xf32>
    %144 = vector.extract_strided_slice %140 {offsets = [0, 0, 0], sizes = [8, 2, 32], strides = [1, 1, 1]} : vector<8x8x32xf32> to vector<8x2x32xf32>
    %145 = vector.extract_strided_slice %140 {offsets = [0, 2, 0], sizes = [8, 2, 32], strides = [1, 1, 1]} : vector<8x8x32xf32> to vector<8x2x32xf32>
    %146 = vector.extract_strided_slice %140 {offsets = [0, 4, 0], sizes = [8, 2, 32], strides = [1, 1, 1]} : vector<8x8x32xf32> to vector<8x2x32xf32>
    %147 = arith.addf %145, %146 : vector<8x2x32xf32>
    %148 = arith.mulf %141, %147 : vector<8x2x32xf32>
    %149 = arith.addf %144, %146 : vector<8x2x32xf32>
    %150 = arith.mulf %142, %149 : vector<8x2x32xf32>
    %151 = arith.addf %148, %150 : vector<8x2x32xf32>
    %cst_38 = arith.constant 2.000000e+00 : f32
    %152 = vector.broadcast %cst_38 : f32 to vector<8x2x32xf32>
    %153 = arith.mulf %152, %143 : vector<8x2x32xf32>
    %154 = arith.mulf %153, %144 : vector<8x2x32xf32>
    %155 = arith.addf %151, %154 : vector<8x2x32xf32>
    %156 = vector.extract_strided_slice %155 {offsets = [0, 0, 0], sizes = [8, 1, 32], strides = [1, 1, 1]} : vector<8x2x32xf32> to vector<8x1x32xf32>
    %157 = vector.shape_cast %156 : vector<8x1x32xf32> to vector<8x32xf32>
    %c0_39 = arith.constant 0 : index
    %c0_40 = arith.constant 0 : index
    %c0_41 = arith.constant 0 : index
    %158 = vector.load %arg4[%c0_39, %c0_40, %c0_41] : memref<2x8x32xf32, #tpu.memory_space<vmem>>, vector<1x8x32xf32>
    %159 = vector.shape_cast %158 : vector<1x8x32xf32> to vector<8x32xf32>
    %160 = vector.shape_cast %157 : vector<8x32xf32> to vector<1x8x32xf32>
    tpu.vector_store %arg4[%c0_39, %c0_40, %c0_41], %160 {strides = array<i32>} : memref<2x8x32xf32, #tpu.memory_space<vmem>>, vector<1x8x32xf32>,
    %161 = vector.extract_strided_slice %155 {offsets = [0, 1, 0], sizes = [8, 1, 32], strides = [1, 1, 1]} : vector<8x2x32xf32> to vector<8x1x32xf32>
    %162 = vector.shape_cast %161 : vector<8x1x32xf32> to vector<8x32xf32>
    %c1_42 = arith.constant 1 : index
    %c0_43 = arith.constant 0 : index
    %c0_44 = arith.constant 0 : index
    %163 = vector.load %arg4[%c1_42, %c0_43, %c0_44] : memref<2x8x32xf32, #tpu.memory_space<vmem>>, vector<1x8x32xf32>
    %164 = vector.shape_cast %163 : vector<1x8x32xf32> to vector<8x32xf32>
    %165 = vector.shape_cast %162 : vector<8x32xf32> to vector<1x8x32xf32>
    tpu.vector_store %arg4[%c1_42, %c0_43, %c0_44], %165 {strides = array<i32>} : memref<2x8x32xf32, #tpu.memory_space<vmem>>, vector<1x8x32xf32>,
    return
  }
  func.func @transform_0(%arg0: i32) -> (i32, i32) {
    %c0_i32 = arith.constant 0 : i32
    %c0_i32_0 = arith.constant 0 : i32
    %c0_i32_1 = arith.constant 0 : i32
    return %c0_i32, %c0_i32_0 : i32, i32
  }
  func.func @transform_1(%arg0: i32) -> (i32, i32) {
    %c0_i32 = arith.constant 0 : i32
    %c0_i32_0 = arith.constant 0 : i32
    %c0_i32_1 = arith.constant 0 : i32
    return %c0_i32, %c0_i32_0 : i32, i32
  }
  func.func @transform_2(%arg0: i32) -> (i32, i32) {
    %c0_i32 = arith.constant 0 : i32
    %c0_i32_0 = arith.constant 0 : i32
    %c0_i32_1 = arith.constant 0 : i32
    return %c0_i32, %c0_i32_0 : i32, i32
  }
  func.func @transform_3(%arg0: i32) -> (i32, i32, i32) {
    %c0_i32 = arith.constant 0 : i32
    %c0_i32_0 = arith.constant 0 : i32
    %c0_i32_1 = arith.constant 0 : i32
    %c0_i32_2 = arith.constant 0 : i32
    return %c0_i32, %c0_i32_0, %c0_i32_1 : i32, i32, i32
  }
}

</mosaic_0001>

<llo_original>
// kernel: tile.29
$region0: #{tile.29}
  %s0 = inlined_call_operand.vmem [shape: f32[32,8,32], index: 0, kind: input, shape index: {}]
  %s1 = inlined_call_operand.vmem [shape: f32[32,256], index: 1, kind: output, shape index: {}]
  %v2 = vld [vmem:[%s0] ss:$4 sm:$0xff]
  %vm3 = vcmask 261120
  %4 = vst.msk [vmem:[%s1] ss:$8 sm:$0x3] %vm3, %v2
  %s5 = scalar_lea.vmem %s1, 4294967281
  %6 = vst.msk [vmem:[%s5] ss:$8 sm:$0xc] %vm3, %v2
  %s7 = scalar_lea.vmem %s1, 4294967266
  %8 = vst.msk [vmem:[%s7] ss:$8 sm:$0x30] %vm3, %v2
  %s9 = scalar_lea.vmem %s1, 4294967251
  %10 = vst.msk [vmem:[%s9] ss:$8 sm:$0xc0] %vm3, %v2
  %s11 = scalar_lea.vmem %s0, 32
  %v12 = vld [vmem:[%s11] ss:$4 sm:$0xff]
  %vm13 = vcmask 261120
  %s14 = scalar_lea.vmem %s1, 4
  %15 = vst.msk [vmem:[%s14] ss:$8 sm:$0x3] %vm13, %v12
  %s16 = scalar_lea.vmem %s1, 4294967285
  %17 = vst.msk [vmem:[%s16] ss:$8 sm:$0xc] %vm13, %v12
  %s18 = scalar_lea.vmem %s1, 4294967270
  %19 = vst.msk [vmem:[%s18] ss:$8 sm:$0x30] %vm13, %v12
  %s20 = scalar_lea.vmem %s1, 4294967255
  %21 = vst.msk [vmem:[%s20] ss:$8 sm:$0xc0] %vm13, %v12
  %s22 = scalar_lea.vmem %s0, 64
  %v23 = vld [vmem:[%s22] ss:$4 sm:$0xff]
  %vm24 = vcmask 261120
  %s25 = scalar_lea.vmem %s1, 16
  %26 = vst.msk [vmem:[%s25] ss:$8 sm:$0x3] %vm24, %v23
  %s27 = scalar_lea.vmem %s1, 1
  %28 = vst.msk [vmem:[%s27] ss:$8 sm:$0xc] %vm24, %v23
  %s29 = scalar_lea.vmem %s1, 4294967282
  %30 = vst.msk [vmem:[%s29] ss:$8 sm:$0x30] %vm24, %v23
  %s31 = scalar_lea.vmem %s1, 4294967267
  %32 = vst.msk [vmem:[%s31] ss:$8 sm:$0xc0] %vm24, %v23
  %s33 = scalar_lea.vmem %s0, 96
  %v34 = vld [vmem:[%s33] ss:$4 sm:$0xff]
  %vm35 = vcmask 261120
  %s36 = scalar_lea.vmem %s1, 20
  %37 = vst.msk [vmem:[%s36] ss:$8 sm:$0x3] %vm35, %v34
  %s38 = scalar_lea.vmem %s1, 5
  %39 = vst.msk [vmem:[%s38] ss:$8 sm:$0xc] %vm35, %v34
  %s40 = scalar_lea.vmem %s1, 4294967286
  %41 = vst.msk [vmem:[%s40] ss:$8 sm:$0x30] %vm35, %v34
  %s42 = scalar_lea.vmem %s1, 4294967271
  %43 = vst.msk [vmem:[%s42] ss:$8 sm:$0xc0] %vm35, %v34
  %s44 = scalar_lea.vmem %s0, 128
  %v45 = vld [vmem:[%s44] ss:$4 sm:$0xff]
  %vm46 = vcmask 261120
  %s47 = scalar_lea.vmem %s1, 32
  %48 = vst.msk [vmem:[%s47] ss:$8 sm:$0x3] %vm46, %v45
  %s49 = scalar_lea.vmem %s1, 17
  %50 = vst.msk [vmem:[%s49] ss:$8 sm:$0xc] %vm46, %v45
  %s51 = scalar_lea.vmem %s1, 2
  %52 = vst.msk [vmem:[%s51] ss:$8 sm:$0x30] %vm46, %v45
  %s53 = scalar_lea.vmem %s1, 4294967283
  %54 = vst.msk [vmem:[%s53] ss:$8 sm:$0xc0] %vm46, %v45
  %s55 = scalar_lea.vmem %s0, 160
  %v56 = vld [vmem:[%s55] ss:$4 sm:$0xff]
  %vm57 = vcmask 261120
  %s58 = scalar_lea.vmem %s1, 36
  %59 = vst.msk [vmem:[%s58] ss:$8 sm:$0x3] %vm57, %v56
  %s60 = scalar_lea.vmem %s1, 21
  %61 = vst.msk [vmem:[%s60] ss:$8 sm:$0xc] %vm57, %v56
  %s62 = scalar_lea.vmem %s1, 6
  %63 = vst.msk [vmem:[%s62] ss:$8 sm:$0x30] %vm57, %v56
  %s64 = scalar_lea.vmem %s1, 4294967287
  %65 = vst.msk [vmem:[%s64] ss:$8 sm:$0xc0] %vm57, %v56
  %s66 = scalar_lea.vmem %s0, 192
  %v67 = vld [vmem:[%s66] ss:$4 sm:$0xff]
  %vm68 = vcmask 261120
  %s69 = scalar_lea.vmem %s1, 48
  %70 = vst.msk [vmem:[%s69] ss:$8 sm:$0x3] %vm68, %v67
  %s71 = scalar_lea.vmem %s1, 33
  %72 = vst.msk [vmem:[%s71] ss:$8 sm:$0xc] %vm68, %v67
  %s73 = scalar_lea.vmem %s1, 18
  %74 = vst.msk [vmem:[%s73] ss:$8 sm:$0x30] %vm68, %v67
  %s75 = scalar_lea.vmem %s1, 3
  %76 = vst.msk [vmem:[%s75] ss:$8 sm:$0xc0] %vm68, %v67
  %s77 = scalar_lea.vmem %s0, 224
  %v78 = vld [vmem:[%s77] ss:$4 sm:$0xff]
  %vm79 = vcmask 261120
  %s80 = scalar_lea.vmem %s1, 52
  %81 = vst.msk [vmem:[%s80] ss:$8 sm:$0x3] %vm79, %v78
  %s82 = scalar_lea.vmem %s1, 37
  %83 = vst.msk [vmem:[%s82] ss:$8 sm:$0xc] %vm79, %v78
  %s84 = scalar_lea.vmem %s1, 22
  %85 = vst.msk [vmem:[%s84] ss:$8 sm:$0x30] %vm79, %v78
  %s86 = scalar_lea.vmem %s1, 7
  %87 = vst.msk [vmem:[%s86] ss:$8 sm:$0xc0] %vm79, %v78
  %s88 = scalar_lea.vmem %s0, 3
  %v89 = vld [vmem:[%s88] ss:$8 sm:$0xf]
  %s90 = scalar_lea.vmem %s0, 3
  %v91 = vld [vmem:[%s90] ss:$8 sm:$0xf0]
  %vm92 = vcmask 1047556
  %v93 = vsel %vm92, %v91, %v89
  %94 = vrot.lane.b32.xlu0 %v93, 96
  %v95 = vpop.permute.xlu0 %94
  %vm96 = vcmask 1048320
  %97 = vst.msk [vmem:[%s1] sm:$0xff] %vm96, %v95
  %s98 = scalar_lea.vmem %s0, 131
  %v99 = vld [vmem:[%s98] ss:$8 sm:$0xf]
  %s100 = scalar_lea.vmem %s0, 131
  %v101 = vld [vmem:[%s100] ss:$8 sm:$0xf0]
  %vm102 = vcmask 1047556
  %v103 = vsel %vm102, %v101, %v99
  %104 = vrot.lane.b32.xlu0 %v103, 96
  %v105 = vpop.permute.xlu0 %104
  %vm106 = vcmask 1048320
  %s107 = scalar_lea.vmem %s1, 32
  %108 = vst.msk [vmem:[%s107] sm:$0xff] %vm106, %v105
  %s109 = scalar_lea.vmem %s0, 7
  %v110 = vld [vmem:[%s109] ss:$8 sm:$0xf]
  %s111 = scalar_lea.vmem %s0, 7
  %v112 = vld [vmem:[%s111] ss:$8 sm:$0xf0]
  %vm113 = vcmask 1047556
  %v114 = vsel %vm113, %v112, %v110
  %115 = vrot.lane.b32.xlu0 %v114, 96
  %v116 = vpop.permute.xlu0 %115
  %vm117 = vcmask 1048320
  %s118 = scalar_lea.vmem %s1, 8
  %119 = vst.msk [vmem:[%s118] sm:$0xff] %vm117, %v116
  %s120 = scalar_lea.vmem %s0, 135
  %v121 = vld [vmem:[%s120] ss:$8 sm:$0xf]
  %s122 = scalar_lea.vmem %s0, 135
  %v123 = vld [vmem:[%s122] ss:$8 sm:$0xf0]
  %vm124 = vcmask 1047556
  %v125 = vsel %vm124, %v123, %v121
  %126 = vrot.lane.b32.xlu0 %v125, 96
  %v127 = vpop.permute.xlu0 %126
  %vm128 = vcmask 1048320
  %s129 = scalar_lea.vmem %s1, 40
  %130 = vst.msk [vmem:[%s129] sm:$0xff] %vm128, %v127
  %s131 = scalar_lea.vmem %s0, 67
  %v132 = vld [vmem:[%s131] ss:$8 sm:$0xf]
  %s133 = scalar_lea.vmem %s0, 67
  %v134 = vld [vmem:[%s133] ss:$8 sm:$0xf0]
  %vm135 = vcmask 1047556
  %v136 = vsel %vm135, %v134, %v132
  %137 = vrot.lane.b32.xlu0 %v136, 96
  %v138 = vpop.permute.xlu0 %137
  %vm139 = vcmask 1048320
  %s140 = scalar_lea.vmem %s1, 16
  %141 = vst.msk [vmem:[%s140] sm:$0xff] %vm139, %v138
  %s142 = scalar_lea.vmem %s0, 195
  %v143 = vld [vmem:[%s142] ss:$8 sm:$0xf]
  %s144 = scalar_lea.vmem %s0, 195
  %v145 = vld [vmem:[%s144] ss:$8 sm:$0xf0]
  %vm146 = vcmask 1047556
  %v147 = vsel %vm146, %v145, %v143
  %148 = vrot.lane.b32.xlu0 %v147, 96
  %v149 = vpop.permute.xlu0 %148
  %vm150 = vcmask 1048320
  %s151 = scalar_lea.vmem %s1, 48
  %152 = vst.msk [vmem:[%s151] sm:$0xff] %vm150, %v149
  %s153 = scalar_lea.vmem %s0, 71
  %v154 = vld [vmem:[%s153] ss:$8 sm:$0xf]
  %s155 = scalar_lea.vmem %s0, 71
  %v156 = vld [vmem:[%s155] ss:$8 sm:$0xf0]
  %vm157 = vcmask 1047556
  %v158 = vsel %vm157, %v156, %v154
  %159 = vrot.lane.b32.xlu0 %v158, 96
  %v160 = vpop.permute.xlu0 %159
  %vm161 = vcmask 1048320
  %s162 = scalar_lea.vmem %s1, 24
  %163 = vst.msk [vmem:[%s162] sm:$0xff] %vm161, %v160
  %s164 = scalar_lea.vmem %s0, 199
  %v165 = vld [vmem:[%s164] ss:$8 sm:$0xf]
  %s166 = scalar_lea.vmem %s0, 199
  %v167 = vld [vmem:[%s166] ss:$8 sm:$0xf0]
  %vm168 = vcmask 1047556
  %v169 = vsel %vm168, %v167, %v165
  %170 = vrot.lane.b32.xlu0 %v169, 96
  %v171 = vpop.permute.xlu0 %170
  %vm172 = vcmask 1048320
  %s173 = scalar_lea.vmem %s1, 56
  %174 = vst.msk [vmem:[%s173] sm:$0xff] %vm172, %v171
  %s175 = scalar_lea.vmem %s0, 2
  %v176 = vld [vmem:[%s175] ss:$8 sm:$0xf]
  %s177 = scalar_lea.vmem %s0, 2
  %v178 = vld [vmem:[%s177] ss:$8 sm:$0xf0]
  %vm179 = vcmask 1047556
  %v180 = vsel %vm179, %v178, %v176
  %181 = vrot.lane.b32.xlu0 %v180, 64
  %v182 = vpop.permute.xlu0 %181
  %vm183 = vcmask 785920
  %184 = vst.msk [vmem:[%s1] sm:$0xff] %vm183, %v182
  %s185 = scalar_lea.vmem %s0, 130
  %v186 = vld [vmem:[%s185] ss:$8 sm:$0xf]
  %s187 = scalar_lea.vmem %s0, 130
  %v188 = vld [vmem:[%s187] ss:$8 sm:$0xf0]
  %vm189 = vcmask 1047556
  %v190 = vsel %vm189, %v188, %v186
  %191 = vrot.lane.b32.xlu0 %v190, 64
  %v192 = vpop.permute.xlu0 %191
  %vm193 = vcmask 785920
  %s194 = scalar_lea.vmem %s1, 32
  %195 = vst.msk [vmem:[%s194] sm:$0xff] %vm193, %v192
  %s196 = scalar_lea.vmem %s0, 6
  %v197 = vld [vmem:[%s196] ss:$8 sm:$0xf]
  %s198 = scalar_lea.vmem %s0, 6
  %v199 = vld [vmem:[%s198] ss:$8 sm:$0xf0]
  %vm200 = vcmask 1047556
  %v201 = vsel %vm200, %v199, %v197
  %202 = vrot.lane.b32.xlu0 %v201, 64
  %v203 = vpop.permute.xlu0 %202
  %vm204 = vcmask 785920
  %s205 = scalar_lea.vmem %s1, 8
  %206 = vst.msk [vmem:[%s205] sm:$0xff] %vm204, %v203
  %s207 = scalar_lea.vmem %s0, 134
  %v208 = vld [vmem:[%s207] ss:$8 sm:$0xf]
  %s209 = scalar_lea.vmem %s0, 134
  %v210 = vld [vmem:[%s209] ss:$8 sm:$0xf0]
  %vm211 = vcmask 1047556
  %v212 = vsel %vm211, %v210, %v208
  %213 = vrot.lane.b32.xlu0 %v212, 64
  %v214 = vpop.permute.xlu0 %213
  %vm215 = vcmask 785920
  %s216 = scalar_lea.vmem %s1, 40
  %217 = vst.msk [vmem:[%s216] sm:$0xff] %vm215, %v214
  %s218 = scalar_lea.vmem %s0, 66
  %v219 = vld [vmem:[%s218] ss:$8 sm:$0xf]
  %s220 = scalar_lea.vmem %s0, 66
  %v221 = vld [vmem:[%s220] ss:$8 sm:$0xf0]
  %vm222 = vcmask 1047556
  %v223 = vsel %vm222, %v221, %v219
  %224 = vrot.lane.b32.xlu0 %v223, 64
  %v225 = vpop.permute.xlu0 %224
  %vm226 = vcmask 785920
  %s227 = scalar_lea.vmem %s1, 16
  %228 = vst.msk [vmem:[%s227] sm:$0xff] %vm226, %v225
  %s229 = scalar_lea.vmem %s0, 194
  %v230 = vld [vmem:[%s229] ss:$8 sm:$0xf]
  %s231 = scalar_lea.vmem %s0, 194
  %v232 = vld [vmem:[%s231] ss:$8 sm:$0xf0]
  %vm233 = vcmask 1047556
  %v234 = vsel %vm233, %v232, %v230
  %235 = vrot.lane.b32.xlu0 %v234, 64
  %v236 = vpop.permute.xlu0 %235
  %vm237 = vcmask 785920
  %s238 = scalar_lea.vmem %s1, 48
  %239 = vst.msk [vmem:[%s238] sm:$0xff] %vm237, %v236
  %s240 = scalar_lea.vmem %s0, 70
  %v241 = vld [vmem:[%s240] ss:$8 sm:$0xf]
  %s242 = scalar_lea.vmem %s0, 70
  %v243 = vld [vmem:[%s242] ss:$8 sm:$0xf0]
  %vm244 = vcmask 1047556
  %v245 = vsel %vm244, %v243, %v241
  %246 = vrot.lane.b32.xlu0 %v245, 64
  %v247 = vpop.permute.xlu0 %246
  %vm248 = vcmask 785920
  %s249 = scalar_lea.vmem %s1, 24
  %250 = vst.msk [vmem:[%s249] sm:$0xff] %vm248, %v247
  %s251 = scalar_lea.vmem %s0, 198
  %v252 = vld [vmem:[%s251] ss:$8 sm:$0xf]
  %s253 = scalar_lea.vmem %s0, 198
  %v254 = vld [vmem:[%s253] ss:$8 sm:$0xf0]
  %vm255 = vcmask 1047556
  %v256 = vsel %vm255, %v254, %v252
  %257 = vrot.lane.b32.xlu0 %v256, 64
  %v258 = vpop.permute.xlu0 %257
  %vm259 = vcmask 785920
  %s260 = scalar_lea.vmem %s1, 56
  %261 = vst.msk [vmem:[%s260] sm:$0xff] %vm259, %v258
  %s262 = scalar_lea.vmem %s0, 1
  %v263 = vld [vmem:[%s262] ss:$8 sm:$0xf]
  %s264 = scalar_lea.vmem %s0, 1
  %v265 = vld [vmem:[%s264] ss:$8 sm:$0xf0]
  %vm266 = vcmask 1047556
  %v267 = vsel %vm266, %v265, %v263
  %268 = vrot.lane.b32.xlu0 %v267, 32
  %v269 = vpop.permute.xlu0 %268
  %vm270 = vcmask 523520
  %271 = vst.msk [vmem:[%s1] sm:$0xff] %vm270, %v269
  %s272 = scalar_lea.vmem %s0, 129
  %v273 = vld [vmem:[%s272] ss:$8 sm:$0xf]
  %s274 = scalar_lea.vmem %s0, 129
  %v275 = vld [vmem:[%s274] ss:$8 sm:$0xf0]
  %vm276 = vcmask 1047556
  %v277 = vsel %vm276, %v275, %v273
  %278 = vrot.lane.b32.xlu0 %v277, 32
  %v279 = vpop.permute.xlu0 %278
  %vm280 = vcmask 523520
  %s281 = scalar_lea.vmem %s1, 32
  %282 = vst.msk [vmem:[%s281] sm:$0xff] %vm280, %v279
  %s283 = scalar_lea.vmem %s0, 5
  %v284 = vld [vmem:[%s283] ss:$8 sm:$0xf]
  %s285 = scalar_lea.vmem %s0, 5
  %v286 = vld [vmem:[%s285] ss:$8 sm:$0xf0]
  %vm287 = vcmask 1047556
  %v288 = vsel %vm287, %v286, %v284
  %289 = vrot.lane.b32.xlu0 %v288, 32
  %v290 = vpop.permute.xlu0 %289
  %vm291 = vcmask 523520
  %s292 = scalar_lea.vmem %s1, 8
  %293 = vst.msk [vmem:[%s292] sm:$0xff] %vm291, %v290
  %s294 = scalar_lea.vmem %s0, 133
  %v295 = vld [vmem:[%s294] ss:$8 sm:$0xf]
  %s296 = scalar_lea.vmem %s0, 133
  %v297 = vld [vmem:[%s296] ss:$8 sm:$0xf0]
  %vm298 = vcmask 1047556
  %v299 = vsel %vm298, %v297, %v295
  %300 = vrot.lane.b32.xlu0 %v299, 32
  %v301 = vpop.permute.xlu0 %300
  %vm302 = vcmask 523520
  %s303 = scalar_lea.vmem %s1, 40
  %304 = vst.msk [vmem:[%s303] sm:$0xff] %vm302, %v301
  %s305 = scalar_lea.vmem %s0, 65
  %v306 = vld [vmem:[%s305] ss:$8 sm:$0xf]
  %s307 = scalar_lea.vmem %s0, 65
  %v308 = vld [vmem:[%s307] ss:$8 sm:$0xf0]
  %vm309 = vcmask 1047556
  %v310 = vsel %vm309, %v308, %v306
  %311 = vrot.lane.b32.xlu0 %v310, 32
  %v312 = vpop.permute.xlu0 %311
  %vm313 = vcmask 523520
  %s314 = scalar_lea.vmem %s1, 16
  %315 = vst.msk [vmem:[%s314] sm:$0xff] %vm313, %v312
  %s316 = scalar_lea.vmem %s0, 193
  %v317 = vld [vmem:[%s316] ss:$8 sm:$0xf]
  %s318 = scalar_lea.vmem %s0, 193
  %v319 = vld [vmem:[%s318] ss:$8 sm:$0xf0]
  %vm320 = vcmask 1047556
  %v321 = vsel %vm320, %v319, %v317
  %322 = vrot.lane.b32.xlu0 %v321, 32
  %v323 = vpop.permute.xlu0 %322
  %vm324 = vcmask 523520
  %s325 = scalar_lea.vmem %s1, 48
  %326 = vst.msk [vmem:[%s325] sm:$0xff] %vm324, %v323
  %s327 = scalar_lea.vmem %s0, 69
  %v328 = vld [vmem:[%s327] ss:$8 sm:$0xf]
  %s329 = scalar_lea.vmem %s0, 69
  %v330 = vld [vmem:[%s329] ss:$8 sm:$0xf0]
  %vm331 = vcmask 1047556
  %v332 = vsel %vm331, %v330, %v328
  %333 = vrot.lane.b32.xlu0 %v332, 32
  %v334 = vpop.permute.xlu0 %333
  %vm335 = vcmask 523520
  %s336 = scalar_lea.vmem %s1, 24
  %337 = vst.msk [vmem:[%s336] sm:$0xff] %vm335, %v334
  %s338 = scalar_lea.vmem %s0, 197
  %v339 = vld [vmem:[%s338] ss:$8 sm:$0xf]
  %s340 = scalar_lea.vmem %s0, 197
  %v341 = vld [vmem:[%s340] ss:$8 sm:$0xf0]
  %vm342 = vcmask 1047556
  %v343 = vsel %vm342, %v341, %v339
  %344 = vrot.lane.b32.xlu0 %v343, 32
  %v345 = vpop.permute.xlu0 %344
  %vm346 = vcmask 523520
  %s347 = scalar_lea.vmem %s1, 56
  %348 = vst.msk [vmem:[%s347] sm:$0xff] %vm346, %v345

// kernel: vim_block3_pallas.1
$region0: #{vim_block3_pallas.1}
  #allocation0 [shape = 'u32[]', space=smem, size = 0x4, offset = 0x4, fixed_abs, tag = 'smem constant byte address 0x4 - core index']
  #allocation1 [shape = 'u32[144,128]{1,0:T(1,128)}', space=vmem, size = 0x12000, scoped, tag = 'internal scratch']
  #allocation2 [shape = 'f32[8,8,256]{2,1,0:T(8,128)}', space=vmem, size = 0x10000, scoped, tag = 'scratch operand']
  %s0 = inlined_call_operand.vmem [shape: f32[64,32], index: 0, kind: input, shape index: {}]
  %s1 = inlined_call_operand.vmem [shape: f32[32,1152], index: 1, kind: input, shape index: {}]
  %s2 = inlined_call_operand.vmem [shape: f32[1,1408], index: 2, kind: input, shape index: {}]
  %s3 = inlined_call_operand.hbm [shape: f32[2,8,32], index: 3, kind: output, shape index: {}]
  %s4 = sld [smem:[#allocation0]]
  $region22: #{vim_block3_pallas.1} parent=0
    _
  %s6 = ssub.s32 1, %s4
  %s7 = scalar_select 0, %s6, %s4
  $region1: #{vim_block3_pallas.1} parent=0
    #allocation3 [shape = 'u8[8192]{0}', space=vmem, size = 0x2000, scoped, tag = 'output window, operand 0, single buffered']
    #allocation4 [shape = 's32[1]{0}', space=sflag, size = 0x4, scoped, tag = 'scoped memory for vim_block3_pallas.1']
    %8 = vsyncpa [#allocation4], 0
    // Predicated region
    $region2: #{vim_block3_pallas.1} parent=1 // pred_check
      _
    $region3: #{vim_block3_pallas.1} parent=1 // pred_check_branch
      %10 = sbr.rel (0) target = $region5
    $region4: #{vim_block3_pallas.1} parent=1 // pred_region
      _
    $region5: #{vim_block3_pallas.1} parent=1 // pred_fallthru
      _
    // Predicated region
    $region6: #{vim_block3_pallas.1} parent=1 // pred_check
      _
    $region7: #{vim_block3_pallas.1} parent=1 // pred_check_branch
      %12 = sbr.rel (0) target = $region9
    $region8: #{vim_block3_pallas.1} parent=1 // pred_region
      _
    $region9: #{vim_block3_pallas.1} parent=1 // pred_fallthru
      _
    // Predicated region
    $region10: #{vim_block3_pallas.1} parent=1 // pred_check
      _
    $region11: #{vim_block3_pallas.1} parent=1 // pred_check_branch
      %14 = sbr.rel (0) target = $region13
    $region12: #{vim_block3_pallas.1} parent=1 // pred_region
      _
    $region13: #{vim_block3_pallas.1} parent=1 // pred_fallthru
      _
    %v15 = vld [vmem:[%s0] sm:$0xff]
    %v16 = vld [vmem:[%s0 + $0x8] sm:$0xff]
    %v17 = vld [vmem:[%s0 + $0x10] sm:$0xff]
    %v18 = vld [vmem:[%s0 + $0x18] sm:$0xff]
    %v19 = vld [vmem:[%s0 + $0x20] sm:$0xff]
    %v20 = vld [vmem:[%s0 + $0x28] sm:$0xff]
    %v21 = vld [vmem:[%s0 + $0x30] sm:$0xff]
    %v22 = vld [vmem:[%s0 + $0x38] sm:$0xff]
    %vm23 = vcmask 261120
    %v24 = vsel %vm23, %v15, 0.0
    %25 = vadd.xlane.f32.xlu0 %v24
    %v26 = vpop.xlane.xlu0 %25
    %v27 = vsel %vm23, %v16, 0.0
    %28 = vadd.xlane.f32.xlu0 %v27
    %v29 = vpop.xlane.xlu0 %28
    %v30 = vsel %vm23, %v17, 0.0
    %31 = vadd.xlane.f32.xlu0 %v30
    %v32 = vpop.xlane.xlu0 %31
    %v33 = vsel %vm23, %v18, 0.0
    %34 = vadd.xlane.f32.xlu0 %v33
    %v35 = vpop.xlane.xlu0 %34
    %v36 = vsel %vm23, %v19, 0.0
    %37 = vadd.xlane.f32.xlu0 %v36
    %v38 = vpop.xlane.xlu0 %37
    %v39 = vsel %vm23, %v20, 0.0
    %40 = vadd.xlane.f32.xlu0 %v39
    %v41 = vpop.xlane.xlu0 %40
    %v42 = vsel %vm23, %v21, 0.0
    %43 = vadd.xlane.f32.xlu0 %v42
    %v44 = vpop.xlane.xlu0 %43
    %v45 = vsel %vm23, %v22, 0.0
    %46 = vadd.xlane.f32.xlu0 %v45
    %v47 = vpop.xlane.xlu0 %46
    %v48 = vrcp.pop 32.0
    %v49 = vmul.f32 %v26, %v48
    %v50 = vmul.f32 %v29, %v48
    %v51 = vmul.f32 %v32, %v48
    %v52 = vmul.f32 %v35, %v48
    %v53 = vmul.f32 %v38, %v48
    %v54 = vmul.f32 %v41, %v48
    %v55 = vmul.f32 %v44, %v48
    %v56 = vmul.f32 %v47, %v48
    %v57 = vsub.f32 %v15, %v49
    %v58 = vsub.f32 %v16, %v50
    %v59 = vsub.f32 %v17, %v51
    %v60 = vsub.f32 %v18, %v52
    %v61 = vsub.f32 %v19, %v53
    %v62 = vsub.f32 %v20, %v54
    %v63 = vsub.f32 %v21, %v55
    %v64 = vsub.f32 %v22, %v56
    %v65 = vmul.f32 %v57, %v57
    %v66 = vmul.f32 %v58, %v58
    %v67 = vmul.f32 %v59, %v59
    %v68 = vmul.f32 %v60, %v60
    %v69 = vmul.f32 %v61, %v61
    %v70 = vmul.f32 %v62, %v62
    %v71 = vmul.f32 %v63, %v63
    %v72 = vmul.f32 %v64, %v64
    %v73 = vsel %vm23, %v65, 0.0
    %74 = vadd.xlane.f32.xlu0 %v73
    %v75 = vpop.xlane.xlu0 %74
    %v76 = vsel %vm23, %v66, 0.0
    %77 = vadd.xlane.f32.xlu0 %v76
    %v78 = vpop.xlane.xlu0 %77
    %v79 = vsel %vm23, %v67, 0.0
    %80 = vadd.xlane.f32.xlu0 %v79
    %v81 = vpop.xlane.xlu0 %80
    %v82 = vsel %vm23, %v68, 0.0
    %83 = vadd.xlane.f32.xlu0 %v82
    %v84 = vpop.xlane.xlu0 %83
    %v85 = vsel %vm23, %v69, 0.0
    %86 = vadd.xlane.f32.xlu0 %v85
    %v87 = vpop.xlane.xlu0 %86
    %v88 = vsel %vm23, %v70, 0.0
    %89 = vadd.xlane.f32.xlu0 %v88
    %v90 = vpop.xlane.xlu0 %89
    %v91 = vsel %vm23, %v71, 0.0
    %92 = vadd.xlane.f32.xlu0 %v91
    %v93 = vpop.xlane.xlu0 %92
    %v94 = vsel %vm23, %v72, 0.0
    %95 = vadd.xlane.f32.xlu0 %v94
    %v96 = vpop.xlane.xlu0 %95
    %v97 = vmul.f32 %v75, %v48
    %v98 = vmul.f32 %v78, %v48
    %v99 = vmul.f32 %v81, %v48
    %v100 = vmul.f32 %v84, %v48
    %v101 = vmul.f32 %v87, %v48
    %v102 = vmul.f32 %v90, %v48
    %v103 = vmul.f32 %v93, %v48
    %v104 = vmul.f32 %v96, %v48
    %v105 = vadd.f32 %v97, 1e-05
    %v106 = vadd.f32 %v98, 1e-05
    %v107 = vadd.f32 %v99, 1e-05
    %v108 = vadd.f32 %v100, 1e-05
    %v109 = vadd.f32 %v101, 1e-05
    %v110 = vadd.f32 %v102, 1e-05
    %v111 = vadd.f32 %v103, 1e-05
    %v112 = vadd.f32 %v104, 1e-05
    %v113 = vrsqrt.pop %v105
    %v114 = vrsqrt.pop %v106
    %v115 = vrsqrt.pop %v107
    %v116 = vrsqrt.pop %v108
    %v117 = vrsqrt.pop %v109
    %v118 = vrsqrt.pop %v110
    %v119 = vrsqrt.pop %v111
    %v120 = vrsqrt.pop %v112
    %v121 = vmul.f32 %v57, %v113
    %v122 = vmul.f32 %v58, %v114
    %v123 = vmul.f32 %v59, %v115
    %v124 = vmul.f32 %v60, %v116
    %v125 = vmul.f32 %v61, %v117
    %v126 = vmul.f32 %v62, %v118
    %v127 = vmul.f32 %v63, %v119
    %v128 = vmul.f32 %v64, %v120
    %v129 = vld [vmem:[%s2] sm:$0xff]
    %v130 = vld [vmem:[%s2 + $0x8] sm:$0x1]
    %v131 = vld [vmem:[%s2 + $0x9] sm:$0x3]
    %v132 = vld [vmem:[%s1] sm:$0xff]
    %v133 = vld [vmem:[%s1 + $0x8] sm:$0xff]
    %v134 = vld [vmem:[%s1 + $0x10] sm:$0xff]
    %v135 = vld [vmem:[%s1 + $0x18] sm:$0xff]
    %v136 = vld [vmem:[%s1 + $0x20] sm:$0xff]
    %v137 = vld [vmem:[%s1 + $0x28] sm:$0xff]
    %v138 = vld [vmem:[%s1 + $0x30] sm:$0xff]
    %v139 = vld [vmem:[%s1 + $0x38] sm:$0xff]
    %v140 = vld [vmem:[%s1 + $0x40] sm:$0xff]
    %v141 = vld [vmem:[%s1 + $0x48] sm:$0xff]
    %v142 = vld [vmem:[%s1 + $0x50] sm:$0xff]
    %v143 = vld [vmem:[%s1 + $0x58] sm:$0xff]
    %v144 = vld [vmem:[%s1 + $0x60] sm:$0xff]
    %v145 = vld [vmem:[%s1 + $0x68] sm:$0xff]
    %v146 = vld [vmem:[%s1 + $0x70] sm:$0xff]
    %v147 = vld [vmem:[%s1 + $0x78] sm:$0xff]
    %v148 = vld [vmem:[%s1 + $0x80] sm:$0xff]
    %v149 = vld [vmem:[%s1 + $0x88] sm:$0xff]
    %v150 = vld [vmem:[%s1 + $0x90] sm:$0xff]
    %v151 = vld [vmem:[%s1 + $0x98] sm:$0xff]
    %v152 = vld [vmem:[%s1 + $0xa0] sm:$0xff]
    %v153 = vld [vmem:[%s1 + $0xa8] sm:$0xff]
    %v154 = vld [vmem:[%s1 + $0xb0] sm:$0xff]
    %v155 = vld [vmem:[%s1 + $0xb8] sm:$0xff]
    %v156 = vld [vmem:[%s1 + $0xc0] sm:$0xff]
    %v157 = vld [vmem:[%s1 + $0xc8] sm:$0xff]
    %v158 = vld [vmem:[%s1 + $0xd0] sm:$0xff]
    %v159 = vld [vmem:[%s1 + $0xd8] sm:$0xff]
    %v160 = vld [vmem:[%s1 + $0xe0] sm:$0xff]
    %v161 = vld [vmem:[%s1 + $0xe8] sm:$0xff]
    %v162 = vld [vmem:[%s1 + $0xf0] sm:$0xff]
    %v163 = vld [vmem:[%s1 + $0xf8] sm:$0xff]
    %v164 = vld [vmem:[%s1 + $0x100] sm:$0xff]
    %v165 = vld [vmem:[%s1 + $0x108] sm:$0xff]
    %v166 = vld [vmem:[%s1 + $0x110] sm:$0xff]
    %v167 = vld [vmem:[%s1 + $0x118] sm:$0xff]
    %v170 = vlaneseq
    %v171 = vshrl.u32 %v170, 7
    %v172 = vsub.s32 0, %v171
    %v173 = vrot.slane %v129, %v172
    %v174 = vlaneseq
    %v175 = vshrl.u32 %v174, 7
    %v176 = vsub.s32 1, %v175
    %v177 = vrot.slane %v129, %v176
    %v178 = vlaneseq
    %v179 = vshrl.u32 %v178, 7
    %v180 = vsub.s32 2, %v179
    %v181 = vrot.slane %v129, %v180
    %v182 = vlaneseq
    %v183 = vshrl.u32 %v182, 7
    %v184 = vsub.s32 3, %v183
    %v185 = vrot.slane %v129, %v184
    %v186 = vlaneseq
    %v187 = vshrl.u32 %v186, 7
    %v188 = vsub.s32 4, %v187
    %v189 = vrot.slane %v129, %v188
    %v190 = vlaneseq
    %v191 = vshrl.u32 %v190, 7
    %v192 = vsub.s32 5, %v191
    %v193 = vrot.slane %v129, %v192
    %v194 = vlaneseq
    %v195 = vshrl.u32 %v194, 7
    %v196 = vsub.s32 6, %v195
    %v197 = vrot.slane %v129, %v196
    %v198 = vlaneseq
    %v199 = vshrl.u32 %v198, 7
    %v200 = vsub.s32 7, %v199
    %v201 = vrot.slane %v129, %v200
    %v202 = vlaneseq
    %v203 = vshrl.u32 %v202, 7
    %v204 = vsub.s32 0, %v203
    %v205 = vrot.slane %v130, %v204
    %v216 = vsel %vm23, %v121, 0
    %v219 = vsel %vm23, %v122, 0
    %v222 = vsel %vm23, %v123, 0
    %v225 = vsel %vm23, %v124, 0
    %v228 = vsel %vm23, %v125, 0
    %v231 = vsel %vm23, %v126, 0
    %v234 = vsel %vm23, %v127, 0
    %v237 = vsel %vm23, %v128, 0
    %239 = vmatprep.subr.mxu0 0.0
    %240 = vmatpush1.msra.mxu0 0.0
    %241 = vmatprep.subr.mxu0 0.0
    %242 = vmatpush1.msra.mxu0 0.0
    %243 = vmatprep.subr.mxu0 0.0
    %244 = vmatpush1.msra.mxu0 0.0
    %245 = vmatprep.subr.mxu0 0.0
    %246 = vmatpush1.msra.mxu0 0.0
    %247 = vmatprep.subr.mxu0 0.0
    %248 = vmatpush1.msra.mxu0 0.0
    %249 = vmatprep.subr.mxu0 0.0
    %250 = vmatpush1.msra.mxu0 0.0
    %251 = vmatprep.subr.mxu0 0.0
    %252 = vmatpush1.msra.mxu0 0.0
    %253 = vmatprep.subr.mxu0 0.0
    %254 = vmatpush1.msra.mxu0 0.0
    %255 = vmatprep.subr.mxu0 0.0
    %256 = vmatpush1.msra.mxu0 0.0
    %257 = vmatprep.subr.mxu0 0.0
    %258 = vmatpush1.msra.mxu0 0.0
    %259 = vmatprep.subr.mxu0 0.0
    %260 = vmatpush1.msra.mxu0 0.0
    %261 = vmatprep.subr.mxu0 0.0
    %262 = vmatpush1.msra.mxu0 0.0
    %263 = vmatprep.subr.mxu0 %v160
    %264 = vmatpush1.msra.mxu0 %v159
    %265 = vmatprep.subr.mxu0 %v151
    %266 = vmatpush1.msra.mxu0 %v150
    %267 = vmatprep.subr.mxu0 %v142
    %268 = vmatpush1.msra.mxu0 %v141
    %269 = vmatprep.subr.mxu0 %v133
    %270 = vmatpush1.msra.mxu0 %v132
    %271 = vmatprep.subr.mxu0 0.0
    %272 = vmatpush2.msra.mxu0 0.0
    %273 = vmatprep.subr.mxu0 0.0
    %274 = vmatpush2.msra.mxu0 0.0
    %275 = vmatprep.subr.mxu0 0.0
    %276 = vmatpush2.msra.mxu0 0.0
    %277 = vmatprep.subr.mxu0 0.0
    %278 = vmatpush2.msra.mxu0 0.0
    %279 = vmatprep.subr.mxu0 0.0
    %280 = vmatpush2.msra.mxu0 0.0
    %281 = vmatprep.subr.mxu0 0.0
    %282 = vmatpush2.msra.mxu0 0.0
    %283 = vmatprep.subr.mxu0 0.0
    %284 = vmatpush2.msra.mxu0 0.0
    %285 = vmatprep.subr.mxu0 0.0
    %286 = vmatpush2.msra.mxu0 0.0
    %287 = vmatprep.subr.mxu0 0.0
    %288 = vmatpush2.msra.mxu0 0.0
    %289 = vmatprep.subr.mxu0 0.0
    %290 = vmatpush2.msra.mxu0 0.0
    %291 = vmatprep.subr.mxu0 0.0
    %292 = vmatpush2.msra.mxu0 0.0
    %293 = vmatprep.subr.mxu0 0.0
    %294 = vmatpush2.msra.mxu0 0.0
    %295 = vmatprep.subr.mxu0 0.0
    %296 = vmatpush2.msra.mxu0 0.0
    %297 = vmatprep.subr.mxu0 0.0
    %298 = vmatpush2.msra.mxu0 0.0
    %299 = vmatprep.subr.mxu0 0.0
    %300 = vmatpush2.msra.mxu0 0.0
    %301 = vmatprep.subr.mxu0 0.0
    %302 = vmatpush2.msra.mxu0 0.0
    %303 = vmatprep.mubr.f32.mxu0 0.0
    %304 = vmatmul.mubr.f32.gmra.mxu0 %v216
    %v305 = vpop.f32.mrf.mxu0
    %v306 = vadd.f32 %v173, %v305
    %v307 = vpop.f32.mrf.mxu0
    %v308 = vadd.f32 %v177, %v307
    %309 = vmatprep.mubr.f32.mxu0 0.0
    %310 = vmatmul.mubr.f32.gmra.mxu0 %v219
    %v311 = vpop.f32.mrf.mxu0
    %v312 = vadd.f32 %v173, %v311
    %v313 = vpop.f32.mrf.mxu0
    %v314 = vadd.f32 %v177, %v313
    %315 = vmatprep.mubr.f32.mxu0 0.0
    %316 = vmatmul.mubr.f32.gmra.mxu0 %v222
    %v317 = vpop.f32.mrf.mxu0
    %v318 = vadd.f32 %v173, %v317
    %v319 = vpop.f32.mrf.mxu0
    %v320 = vadd.f32 %v177, %v319
    %321 = vmatprep.mubr.f32.mxu0 0.0
    %322 = vmatmul.mubr.f32.gmra.mxu0 %v225
    %v323 = vpop.f32.mrf.mxu0
    %v324 = vadd.f32 %v173, %v323
    %v325 = vpop.f32.mrf.mxu0
    %v326 = vadd.f32 %v177, %v325
    %327 = vmatprep.mubr.f32.mxu0 0.0
    %328 = vmatmul.mubr.f32.gmra.mxu0 %v228
    %v329 = vpop.f32.mrf.mxu0
    %v330 = vadd.f32 %v173, %v329
    %v331 = vpop.f32.mrf.mxu0
    %v332 = vadd.f32 %v177, %v331
    %333 = vmatprep.mubr.f32.mxu0 0.0
    %334 = vmatmul.mubr.f32.gmra.mxu0 %v231
    %v335 = vpop.f32.mrf.mxu0
    %v336 = vadd.f32 %v173, %v335
    %v337 = vpop.f32.mrf.mxu0
    %v338 = vadd.f32 %v177, %v337
    %339 = vmatprep.mubr.f32.mxu0 0.0
    %340 = vmatmul.mubr.f32.gmra.mxu0 %v234
    %v341 = vpop.f32.mrf.mxu0
    %v342 = vadd.f32 %v173, %v341
    %v343 = vpop.f32.mrf.mxu0
    %v344 = vadd.f32 %v177, %v343
    %345 = vmatprep.mubr.f32.mxu0 0.0
    %346 = vmatmul.mubr.f32.gmra.mxu0 %v237
    %v347 = vpop.f32.mrf.mxu0
    %v348 = vadd.f32 %v173, %v347
    %v349 = vpop.f32.mrf.mxu0
    %v350 = vadd.f32 %v177, %v349
    %351 = vdwg.mxu0
    %352 = vmatprep.subr.mxu0 0.0
    %353 = vmatpush1.msra.mxu0 0.0
    %354 = vmatprep.subr.mxu0 0.0
    %355 = vmatpush1.msra.mxu0 0.0
    %356 = vmatprep.subr.mxu0 0.0
    %357 = vmatpush1.msra.mxu0 0.0
    %358 = vmatprep.subr.mxu0 0.0
    %359 = vmatpush1.msra.mxu0 0.0
    %360 = vmatprep.subr.mxu0 0.0
    %361 = vmatpush1.msra.mxu0 0.0
    %362 = vmatprep.subr.mxu0 0.0
    %363 = vmatpush1.msra.mxu0 0.0
    %364 = vmatprep.subr.mxu0 0.0
    %365 = vmatpush1.msra.mxu0 0.0
    %366 = vmatprep.subr.mxu0 0.0
    %367 = vmatpush1.msra.mxu0 0.0
    %368 = vmatprep.subr.mxu0 0.0
    %369 = vmatpush1.msra.mxu0 0.0
    %370 = vmatprep.subr.mxu0 0.0
    %371 = vmatpush1.msra.mxu0 0.0
    %372 = vmatprep.subr.mxu0 0.0
    %373 = vmatpush1.msra.mxu0 0.0
    %374 = vmatprep.subr.mxu0 0.0
    %375 = vmatpush1.msra.mxu0 0.0
    %376 = vmatprep.subr.mxu0 %v162
    %377 = vmatpush1.msra.mxu0 %v161
    %378 = vmatprep.subr.mxu0 %v153
    %379 = vmatpush1.msra.mxu0 %v152
    %380 = vmatprep.subr.mxu0 %v144
    %381 = vmatpush1.msra.mxu0 %v143
    %382 = vmatprep.subr.mxu0 %v135
    %383 = vmatpush1.msra.mxu0 %v134
    %384 = vmatprep.subr.mxu0 0.0
    %385 = vmatpush2.msra.mxu0 0.0
    %386 = vmatprep.subr.mxu0 0.0
    %387 = vmatpush2.msra.mxu0 0.0
    %388 = vmatprep.subr.mxu0 0.0
    %389 = vmatpush2.msra.mxu0 0.0
    %390 = vmatprep.subr.mxu0 0.0
    %391 = vmatpush2.msra.mxu0 0.0
    %392 = vmatprep.subr.mxu0 0.0
    %393 = vmatpush2.msra.mxu0 0.0
    %394 = vmatprep.subr.mxu0 0.0
    %395 = vmatpush2.msra.mxu0 0.0
    %396 = vmatprep.subr.mxu0 0.0
    %397 = vmatpush2.msra.mxu0 0.0
    %398 = vmatprep.subr.mxu0 0.0
    %399 = vmatpush2.msra.mxu0 0.0
    %400 = vmatprep.subr.mxu0 0.0
    %401 = vmatpush2.msra.mxu0 0.0
    %402 = vmatprep.subr.mxu0 0.0
    %403 = vmatpush2.msra.mxu0 0.0
    %404 = vmatprep.subr.mxu0 0.0
    %405 = vmatpush2.msra.mxu0 0.0
    %406 = vmatprep.subr.mxu0 0.0
    %407 = vmatpush2.msra.mxu0 0.0
    %408 = vmatprep.subr.mxu0 0.0
    %409 = vmatpush2.msra.mxu0 0.0
    %410 = vmatprep.subr.mxu0 0.0
    %411 = vmatpush2.msra.mxu0 0.0
    %412 = vmatprep.subr.mxu0 0.0
    %413 = vmatpush2.msra.mxu0 0.0
    %414 = vmatprep.subr.mxu0 0.0
    %415 = vmatpush2.msra.mxu0 0.0
    %416 = vmatprep.mubr.f32.mxu0 0.0
    %417 = vmatmul.mubr.f32.gmra.mxu0 %v216
    %v418 = vpop.f32.mrf.mxu0
    %v419 = vadd.f32 %v181, %v418
    %v420 = vpop.f32.mrf.mxu0
    %v421 = vadd.f32 %v185, %v420
    %422 = vmatprep.mubr.f32.mxu0 0.0
    %423 = vmatmul.mubr.f32.gmra.mxu0 %v219
    %v424 = vpop.f32.mrf.mxu0
    %v425 = vadd.f32 %v181, %v424
    %v426 = vpop.f32.mrf.mxu0
    %v427 = vadd.f32 %v185, %v426
    %428 = vmatprep.mubr.f32.mxu0 0.0
    %429 = vmatmul.mubr.f32.gmra.mxu0 %v222
    %v430 = vpop.f32.mrf.mxu0
    %v431 = vadd.f32 %v181, %v430
    %v432 = vpop.f32.mrf.mxu0
    %v433 = vadd.f32 %v185, %v432
    %434 = vmatprep.mubr.f32.mxu0 0.0
    %435 = vmatmul.mubr.f32.gmra.mxu0 %v225
    %v436 = vpop.f32.mrf.mxu0
    %v437 = vadd.f32 %v181, %v436
    %v438 = vpop.f32.mrf.mxu0
    %v439 = vadd.f32 %v185, %v438
    %440 = vmatprep.mubr.f32.mxu0 0.0
    %441 = vmatmul.mubr.f32.gmra.mxu0 %v228
    %v442 = vpop.f32.mrf.mxu0
    %v443 = vadd.f32 %v181, %v442
    %v444 = vpop.f32.mrf.mxu0
    %v445 = vadd.f32 %v185, %v444
    %446 = vmatprep.mubr.f32.mxu0 0.0
    %447 = vmatmul.mubr.f32.gmra.mxu0 %v231
    %v448 = vpop.f32.mrf.mxu0
    %v449 = vadd.f32 %v181, %v448
    %v450 = vpop.f32.mrf.mxu0
    %v451 = vadd.f32 %v185, %v450
    %452 = vmatprep.mubr.f32.mxu0 0.0
    %453 = vmatmul.mubr.f32.gmra.mxu0 %v234
    %v454 = vpop.f32.mrf.mxu0
    %v455 = vadd.f32 %v181, %v454
    %v456 = vpop.f32.mrf.mxu0
    %v457 = vadd.f32 %v185, %v456
    %458 = vmatprep.mubr.f32.mxu0 0.0
    %459 = vmatmul.mubr.f32.gmra.mxu0 %v237
    %v460 = vpop.f32.mrf.mxu0
    %v461 = vadd.f32 %v181, %v460
    %v462 = vpop.f32.mrf.mxu0
    %v463 = vadd.f32 %v185, %v462
    %464 = vdwg.mxu0
    %465 = vmatprep.subr.mxu0 0.0
    %466 = vmatpush1.msra.mxu0 0.0
    %467 = vmatprep.subr.mxu0 0.0
    %468 = vmatpush1.msra.mxu0 0.0
    %469 = vmatprep.subr.mxu0 0.0
    %470 = vmatpush1.msra.mxu0 0.0
    %471 = vmatprep.subr.mxu0 0.0
    %472 = vmatpush1.msra.mxu0 0.0
    %473 = vmatprep.subr.mxu0 0.0
    %474 = vmatpush1.msra.mxu0 0.0
    %475 = vmatprep.subr.mxu0 0.0
    %476 = vmatpush1.msra.mxu0 0.0
    %477 = vmatprep.subr.mxu0 0.0
    %478 = vmatpush1.msra.mxu0 0.0
    %479 = vmatprep.subr.mxu0 0.0
    %480 = vmatpush1.msra.mxu0 0.0
    %481 = vmatprep.subr.mxu0 0.0
    %482 = vmatpush1.msra.mxu0 0.0
    %483 = vmatprep.subr.mxu0 0.0
    %484 = vmatpush1.msra.mxu0 0.0
    %485 = vmatprep.subr.mxu0 0.0
    %486 = vmatpush1.msra.mxu0 0.0
    %487 = vmatprep.subr.mxu0 0.0
    %488 = vmatpush1.msra.mxu0 0.0
    %489 = vmatprep.subr.mxu0 %v164
    %490 = vmatpush1.msra.mxu0 %v163
    %491 = vmatprep.subr.mxu0 %v155
    %492 = vmatpush1.msra.mxu0 %v154
    %493 = vmatprep.subr.mxu0 %v146
    %494 = vmatpush1.msra.mxu0 %v145
    %495 = vmatprep.subr.mxu0 %v137
    %496 = vmatpush1.msra.mxu0 %v136
    %497 = vmatprep.subr.mxu0 0.0
    %498 = vmatpush2.msra.mxu0 0.0
    %499 = vmatprep.subr.mxu0 0.0
    %500 = vmatpush2.msra.mxu0 0.0
    %501 = vmatprep.subr.mxu0 0.0
    %502 = vmatpush2.msra.mxu0 0.0
    %503 = vmatprep.subr.mxu0 0.0
    %504 = vmatpush2.msra.mxu0 0.0
    %505 = vmatprep.subr.mxu0 0.0
    %506 = vmatpush2.msra.mxu0 0.0
    %507 = vmatprep.subr.mxu0 0.0
    %508 = vmatpush2.msra.mxu0 0.0
    %509 = vmatprep.subr.mxu0 0.0
    %510 = vmatpush2.msra.mxu0 0.0
    %511 = vmatprep.subr.mxu0 0.0
    %512 = vmatpush2.msra.mxu0 0.0
    %513 = vmatprep.subr.mxu0 0.0
    %514 = vmatpush2.msra.mxu0 0.0
    %515 = vmatprep.subr.mxu0 0.0
    %516 = vmatpush2.msra.mxu0 0.0
    %517 = vmatprep.subr.mxu0 0.0
    %518 = vmatpush2.msra.mxu0 0.0
    %519 = vmatprep.subr.mxu0 0.0
    %520 = vmatpush2.msra.mxu0 0.0
    %521 = vmatprep.subr.mxu0 0.0
    %522 = vmatpush2.msra.mxu0 0.0
    %523 = vmatprep.subr.mxu0 0.0
    %524 = vmatpush2.msra.mxu0 0.0
    %525 = vmatprep.subr.mxu0 0.0
    %526 = vmatpush2.msra.mxu0 0.0
    %527 = vmatprep.subr.mxu0 0.0
    %528 = vmatpush2.msra.mxu0 0.0
    %529 = vmatprep.mubr.f32.mxu0 0.0
    %530 = vmatmul.mubr.f32.gmra.mxu0 %v216
    %v531 = vpop.f32.mrf.mxu0
    %v532 = vadd.f32 %v189, %v531
    %v533 = vpop.f32.mrf.mxu0
    %v534 = vadd.f32 %v193, %v533
    %535 = vmatprep.mubr.f32.mxu0 0.0
    %536 = vmatmul.mubr.f32.gmra.mxu0 %v219
    %v537 = vpop.f32.mrf.mxu0
    %v538 = vadd.f32 %v189, %v537
    %v539 = vpop.f32.mrf.mxu0
    %v540 = vadd.f32 %v193, %v539
    %541 = vmatprep.mubr.f32.mxu0 0.0
    %542 = vmatmul.mubr.f32.gmra.mxu0 %v222
    %v543 = vpop.f32.mrf.mxu0
    %v544 = vadd.f32 %v189, %v543
    %v545 = vpop.f32.mrf.mxu0
    %v546 = vadd.f32 %v193, %v545
    %547 = vmatprep.mubr.f32.mxu0 0.0
    %548 = vmatmul.mubr.f32.gmra.mxu0 %v225
    %v549 = vpop.f32.mrf.mxu0
    %v550 = vadd.f32 %v189, %v549
    %v551 = vpop.f32.mrf.mxu0
    %v552 = vadd.f32 %v193, %v551
    %553 = vmatprep.mubr.f32.mxu0 0.0
    %554 = vmatmul.mubr.f32.gmra.mxu0 %v228
    %v555 = vpop.f32.mrf.mxu0
    %v556 = vadd.f32 %v189, %v555
    %v557 = vpop.f32.mrf.mxu0
    %v558 = vadd.f32 %v193, %v557
    %559 = vmatprep.mubr.f32.mxu0 0.0
    %560 = vmatmul.mubr.f32.gmra.mxu0 %v231
    %v561 = vpop.f32.mrf.mxu0
    %v562 = vadd.f32 %v189, %v561
    %v563 = vpop.f32.mrf.mxu0
    %v564 = vadd.f32 %v193, %v563
    %565 = vmatprep.mubr.f32.mxu0 0.0
    %566 = vmatmul.mubr.f32.gmra.mxu0 %v234
    %v567 = vpop.f32.mrf.mxu0
    %v568 = vadd.f32 %v189, %v567
    %v569 = vpop.f32.mrf.mxu0
    %v570 = vadd.f32 %v193, %v569
    %571 = vmatprep.mubr.f32.mxu0 0.0
    %572 = vmatmul.mubr.f32.gmra.mxu0 %v237
    %v573 = vpop.f32.mrf.mxu0
    %v574 = vadd.f32 %v189, %v573
    %v575 = vpop.f32.mrf.mxu0
    %v576 = vadd.f32 %v193, %v575
    %577 = vdwg.mxu0
    %578 = vmatprep.subr.mxu0 0.0
    %579 = vmatpush1.msra.mxu0 0.0
    %580 = vmatprep.subr.mxu0 0.0
    %581 = vmatpush1.msra.mxu0 0.0
    %582 = vmatprep.subr.mxu0 0.0
    %583 = vmatpush1.msra.mxu0 0.0
    %584 = vmatprep.subr.mxu0 0.0
    %585 = vmatpush1.msra.mxu0 0.0
    %586 = vmatprep.subr.mxu0 0.0
    %587 = vmatpush1.msra.mxu0 0.0
    %588 = vmatprep.subr.mxu0 0.0
    %589 = vmatpush1.msra.mxu0 0.0
    %590 = vmatprep.subr.mxu0 0.0
    %591 = vmatpush1.msra.mxu0 0.0
    %592 = vmatprep.subr.mxu0 0.0
    %593 = vmatpush1.msra.mxu0 0.0
    %594 = vmatprep.subr.mxu0 0.0
    %595 = vmatpush1.msra.mxu0 0.0
    %596 = vmatprep.subr.mxu0 0.0
    %597 = vmatpush1.msra.mxu0 0.0
    %598 = vmatprep.subr.mxu0 0.0
    %599 = vmatpush1.msra.mxu0 0.0
    %600 = vmatprep.subr.mxu0 0.0
    %601 = vmatpush1.msra.mxu0 0.0
    %602 = vmatprep.subr.mxu0 %v166
    %603 = vmatpush1.msra.mxu0 %v165
    %604 = vmatprep.subr.mxu0 %v157
    %605 = vmatpush1.msra.mxu0 %v156
    %606 = vmatprep.subr.mxu0 %v148
    %607 = vmatpush1.msra.mxu0 %v147
    %608 = vmatprep.subr.mxu0 %v139
    %609 = vmatpush1.msra.mxu0 %v138
    %610 = vmatprep.subr.mxu0 0.0
    %611 = vmatpush2.msra.mxu0 0.0
    %612 = vmatprep.subr.mxu0 0.0
    %613 = vmatpush2.msra.mxu0 0.0
    %614 = vmatprep.subr.mxu0 0.0
    %615 = vmatpush2.msra.mxu0 0.0
    %616 = vmatprep.subr.mxu0 0.0
    %617 = vmatpush2.msra.mxu0 0.0
    %618 = vmatprep.subr.mxu0 0.0
    %619 = vmatpush2.msra.mxu0 0.0
    %620 = vmatprep.subr.mxu0 0.0
    %621 = vmatpush2.msra.mxu0 0.0
    %622 = vmatprep.subr.mxu0 0.0
    %623 = vmatpush2.msra.mxu0 0.0
    %624 = vmatprep.subr.mxu0 0.0
    %625 = vmatpush2.msra.mxu0 0.0
    %626 = vmatprep.subr.mxu0 0.0
    %627 = vmatpush2.msra.mxu0 0.0
    %628 = vmatprep.subr.mxu0 0.0
    %629 = vmatpush2.msra.mxu0 0.0
    %630 = vmatprep.subr.mxu0 0.0
    %631 = vmatpush2.msra.mxu0 0.0
    %632 = vmatprep.subr.mxu0 0.0
    %633 = vmatpush2.msra.mxu0 0.0
    %634 = vmatprep.subr.mxu0 0.0
    %635 = vmatpush2.msra.mxu0 0.0
    %636 = vmatprep.subr.mxu0 0.0
    %637 = vmatpush2.msra.mxu0 0.0
    %638 = vmatprep.subr.mxu0 0.0
    %639 = vmatpush2.msra.mxu0 0.0
    %640 = vmatprep.subr.mxu0 0.0
    %641 = vmatpush2.msra.mxu0 0.0
    %642 = vmatprep.mubr.f32.mxu0 0.0
    %643 = vmatmul.mubr.f32.gmra.mxu0 %v216
    %v644 = vpop.f32.mrf.mxu0
    %v645 = vadd.f32 %v197, %v644
    %v646 = vpop.f32.mrf.mxu0
    %v647 = vadd.f32 %v201, %v646
    %648 = vmatprep.mubr.f32.mxu0 0.0
    %649 = vmatmul.mubr.f32.gmra.mxu0 %v219
    %v650 = vpop.f32.mrf.mxu0
    %v651 = vadd.f32 %v197, %v650
    %v652 = vpop.f32.mrf.mxu0
    %v653 = vadd.f32 %v201, %v652
    %654 = vmatprep.mubr.f32.mxu0 0.0
    %655 = vmatmul.mubr.f32.gmra.mxu0 %v222
    %v656 = vpop.f32.mrf.mxu0
    %v657 = vadd.f32 %v197, %v656
    %v658 = vpop.f32.mrf.mxu0
    %v659 = vadd.f32 %v201, %v658
    %660 = vmatprep.mubr.f32.mxu0 0.0
    %661 = vmatmul.mubr.f32.gmra.mxu0 %v225
    %v662 = vpop.f32.mrf.mxu0
    %v663 = vadd.f32 %v197, %v662
    %v664 = vpop.f32.mrf.mxu0
    %v665 = vadd.f32 %v201, %v664
    %666 = vmatprep.mubr.f32.mxu0 0.0
    %667 = vmatmul.mubr.f32.gmra.mxu0 %v228
    %v668 = vpop.f32.mrf.mxu0
    %v669 = vadd.f32 %v197, %v668
    %v670 = vpop.f32.mrf.mxu0
    %v671 = vadd.f32 %v201, %v670
    %672 = vmatprep.mubr.f32.mxu0 0.0
    %673 = vmatmul.mubr.f32.gmra.mxu0 %v231
    %v674 = vpop.f32.mrf.mxu0
    %v675 = vadd.f32 %v197, %v674
    %v676 = vpop.f32.mrf.mxu0
    %v677 = vadd.f32 %v201, %v676
    %678 = vmatprep.mubr.f32.mxu0 0.0
    %679 = vmatmul.mubr.f32.gmra.mxu0 %v234
    %v680 = vpop.f32.mrf.mxu0
    %v681 = vadd.f32 %v197, %v680
    %v682 = vpop.f32.mrf.mxu0
    %v683 = vadd.f32 %v201, %v682
    %684 = vmatprep.mubr.f32.mxu0 0.0
    %685 = vmatmul.mubr.f32.gmra.mxu0 %v237
    %v686 = vpop.f32.mrf.mxu0
    %v687 = vadd.f32 %v197, %v686
    %v688 = vpop.f32.mrf.mxu0
    %v689 = vadd.f32 %v201, %v688
    %690 = vdwg.mxu0
    %691 = vmatprep.subr.mxu0 0.0
    %692 = vmatpush1.msra.mxu0 0.0
    %693 = vmatprep.subr.mxu0 0.0
    %694 = vmatpush1.msra.mxu0 0.0
    %695 = vmatprep.subr.mxu0 0.0
    %696 = vmatpush1.msra.mxu0 0.0
    %697 = vmatprep.subr.mxu0 0.0
    %698 = vmatpush1.msra.mxu0 0.0
    %699 = vmatprep.subr.mxu0 0.0
    %700 = vmatpush1.msra.mxu0 0.0
    %701 = vmatprep.subr.mxu0 0.0
    %702 = vmatpush1.msra.mxu0 0.0
    %703 = vmatprep.subr.mxu0 0.0
    %704 = vmatpush1.msra.mxu0 0.0
    %705 = vmatprep.subr.mxu0 0.0
    %706 = vmatpush1.msra.mxu0 0.0
    %707 = vmatprep.subr.mxu0 0.0
    %708 = vmatpush1.msra.mxu0 0.0
    %709 = vmatprep.subr.mxu0 0.0
    %710 = vmatpush1.msra.mxu0 0.0
    %711 = vmatprep.subr.mxu0 0.0
    %712 = vmatpush1.msra.mxu0 0.0
    %713 = vmatprep.subr.mxu0 0.0
    %714 = vmatpush1.msra.mxu0 0.0
    %715 = vmatprep.subr.mxu0 0.0
    %716 = vmatpush1.msra.mxu0 %v167
    %717 = vmatprep.subr.mxu0 0.0
    %718 = vmatpush1.msra.mxu0 %v158
    %719 = vmatprep.subr.mxu0 0.0
    %720 = vmatpush1.msra.mxu0 %v149
    %721 = vmatprep.subr.mxu0 0.0
    %722 = vmatpush1.msra.mxu0 %v140
    %723 = vmatprep.subr.mxu0 0.0
    %724 = vmatpush2.msra.mxu0 0.0
    %725 = vmatprep.subr.mxu0 0.0
    %726 = vmatpush2.msra.mxu0 0.0
    %727 = vmatprep.subr.mxu0 0.0
    %728 = vmatpush2.msra.mxu0 0.0
    %729 = vmatprep.subr.mxu0 0.0
    %730 = vmatpush2.msra.mxu0 0.0
    %731 = vmatprep.subr.mxu0 0.0
    %732 = vmatpush2.msra.mxu0 0.0
    %733 = vmatprep.subr.mxu0 0.0
    %734 = vmatpush2.msra.mxu0 0.0
    %735 = vmatprep.subr.mxu0 0.0
    %736 = vmatpush2.msra.mxu0 0.0
    %737 = vmatprep.subr.mxu0 0.0
    %738 = vmatpush2.msra.mxu0 0.0
    %739 = vmatprep.subr.mxu0 0.0
    %740 = vmatpush2.msra.mxu0 0.0
    %741 = vmatprep.subr.mxu0 0.0
    %742 = vmatpush2.msra.mxu0 0.0
    %743 = vmatprep.subr.mxu0 0.0
    %744 = vmatpush2.msra.mxu0 0.0
    %745 = vmatprep.subr.mxu0 0.0
    %746 = vmatpush2.msra.mxu0 0.0
    %747 = vmatprep.subr.mxu0 0.0
    %748 = vmatpush2.msra.mxu0 0.0
    %749 = vmatprep.subr.mxu0 0.0
    %750 = vmatpush2.msra.mxu0 0.0
    %751 = vmatprep.subr.mxu0 0.0
    %752 = vmatpush2.msra.mxu0 0.0
    %753 = vmatprep.subr.mxu0 0.0
    %754 = vmatpush2.msra.mxu0 0.0
    %755 = vmatprep.mubr.f32.mxu0 0.0
    %756 = vmatmul.mubr.f32.gmra.mxu0 %v216
    %v757 = vpop.f32.mrf.mxu0
    %v758 = vadd.f32 %v205, %v757
    %v759 = vpop.f32.mrf.mxu0
    %760 = vmatprep.mubr.f32.mxu0 0.0
    %761 = vmatmul.mubr.f32.gmra.mxu0 %v219
    %v762 = vpop.f32.mrf.mxu0
    %v763 = vadd.f32 %v205, %v762
    %v764 = vpop.f32.mrf.mxu0
    %765 = vmatprep.mubr.f32.mxu0 0.0
    %766 = vmatmul.mubr.f32.gmra.mxu0 %v222
    %v767 = vpop.f32.mrf.mxu0
    %v768 = vadd.f32 %v205, %v767
    %v769 = vpop.f32.mrf.mxu0
    %770 = vmatprep.mubr.f32.mxu0 0.0
    %771 = vmatmul.mubr.f32.gmra.mxu0 %v225
    %v772 = vpop.f32.mrf.mxu0
    %v773 = vadd.f32 %v205, %v772
    %v774 = vpop.f32.mrf.mxu0
    %775 = vmatprep.mubr.f32.mxu0 0.0
    %776 = vmatmul.mubr.f32.gmra.mxu0 %v228
    %v777 = vpop.f32.mrf.mxu0
    %v778 = vadd.f32 %v205, %v777
    %v779 = vpop.f32.mrf.mxu0
    %780 = vmatprep.mubr.f32.mxu0 0.0
    %781 = vmatmul.mubr.f32.gmra.mxu0 %v231
    %v782 = vpop.f32.mrf.mxu0
    %v783 = vadd.f32 %v205, %v782
    %v784 = vpop.f32.mrf.mxu0
    %785 = vmatprep.mubr.f32.mxu0 0.0
    %786 = vmatmul.mubr.f32.gmra.mxu0 %v234
    %v787 = vpop.f32.mrf.mxu0
    %v788 = vadd.f32 %v205, %v787
    %v789 = vpop.f32.mrf.mxu0
    %790 = vmatprep.mubr.f32.mxu0 0.0
    %791 = vmatmul.mubr.f32.gmra.mxu0 %v237
    %v792 = vpop.f32.mrf.mxu0
    %v793 = vadd.f32 %v205, %v792
    %v794 = vpop.f32.mrf.mxu0
    %795 = vdwg.mxu0
    %vm796 = vcmp.gt.f32.partialorder %v421, 20.0
    %vm797 = vcmp.gt.f32.partialorder %v532, 20.0
    %vm798 = vcmp.gt.f32.partialorder %v427, 20.0
    %vm799 = vcmp.gt.f32.partialorder %v538, 20.0
    %vm800 = vcmp.gt.f32.partialorder %v433, 20.0
    %vm801 = vcmp.gt.f32.partialorder %v544, 20.0
    %vm802 = vcmp.gt.f32.partialorder %v439, 20.0
    %vm803 = vcmp.gt.f32.partialorder %v550, 20.0
    %vm804 = vcmp.gt.f32.partialorder %v445, 20.0
    %vm805 = vcmp.gt.f32.partialorder %v556, 20.0
    %vm806 = vcmp.gt.f32.partialorder %v451, 20.0
    %vm807 = vcmp.gt.f32.partialorder %v562, 20.0
    %vm808 = vcmp.gt.f32.partialorder %v457, 20.0
    %vm809 = vcmp.gt.f32.partialorder %v568, 20.0
    %vm810 = vcmp.gt.f32.partialorder %v463, 20.0
    %vm811 = vcmp.gt.f32.partialorder %v574, 20.0
    %v812 = vmin.f32 %v421, 20.0
    %v813 = vmin.f32 %v532, 20.0
    %v814 = vmin.f32 %v427, 20.0
    %v815 = vmin.f32 %v538, 20.0
    %v816 = vmin.f32 %v433, 20.0
    %v817 = vmin.f32 %v544, 20.0
    %v818 = vmin.f32 %v439, 20.0
    %v819 = vmin.f32 %v550, 20.0
    %v820 = vmin.f32 %v445, 20.0
    %v821 = vmin.f32 %v556, 20.0
    %v822 = vmin.f32 %v451, 20.0
    %v823 = vmin.f32 %v562, 20.0
    %v824 = vmin.f32 %v457, 20.0
    %v825 = vmin.f32 %v568, 20.0
    %v826 = vmin.f32 %v463, 20.0
    %v827 = vmin.f32 %v574, 20.0
    %v828 = vmul.f32 %v812, 1.442695
    %v829 = vpow.pop %v828
    %v830 = vmul.f32 %v813, 1.442695
    %v831 = vpow.pop %v830
    %v832 = vmul.f32 %v814, 1.442695
    %v833 = vpow.pop %v832
    %v834 = vmul.f32 %v815, 1.442695
    %v835 = vpow.pop %v834
    %v836 = vmul.f32 %v816, 1.442695
    %v837 = vpow.pop %v836
    %v838 = vmul.f32 %v817, 1.442695
    %v839 = vpow.pop %v838
    %v840 = vmul.f32 %v818, 1.442695
    %v841 = vpow.pop %v840
    %v842 = vmul.f32 %v819, 1.442695
    %v843 = vpow.pop %v842
    %v844 = vmul.f32 %v820, 1.442695
    %v845 = vpow.pop %v844
    %v846 = vmul.f32 %v821, 1.442695
    %v847 = vpow.pop %v846
    %v848 = vmul.f32 %v822, 1.442695
    %v849 = vpow.pop %v848
    %v850 = vmul.f32 %v823, 1.442695
    %v851 = vpow.pop %v850
    %v852 = vmul.f32 %v824, 1.442695
    %v853 = vpow.pop %v852
    %v854 = vmul.f32 %v825, 1.442695
    %v855 = vpow.pop %v854
    %v856 = vmul.f32 %v826, 1.442695
    %v857 = vpow.pop %v856
    %v858 = vmul.f32 %v827, 1.442695
    %v859 = vpow.pop %v858
    %v860 = vadd.f32 %v829, 1.0
    %v861 = vadd.f32 %v831, 1.0
    %v862 = vadd.f32 %v833, 1.0
    %v863 = vadd.f32 %v835, 1.0
    %v864 = vadd.f32 %v837, 1.0
    %v865 = vadd.f32 %v839, 1.0
    %v866 = vadd.f32 %v841, 1.0
    %v867 = vadd.f32 %v843, 1.0
    %v868 = vadd.f32 %v845, 1.0
    %v869 = vadd.f32 %v847, 1.0
    %v870 = vadd.f32 %v849, 1.0
    %v871 = vadd.f32 %v851, 1.0
    %v872 = vadd.f32 %v853, 1.0
    %v873 = vadd.f32 %v855, 1.0
    %v874 = vadd.f32 %v857, 1.0
    %v875 = vadd.f32 %v859, 1.0
    %v876 = vlog2.pop %v860
    %v877 = vmul.f32 %v876, 0.6931472
    %v878 = vlog2.pop %v861
    %v879 = vmul.f32 %v878, 0.6931472
    %v880 = vlog2.pop %v862
    %v881 = vmul.f32 %v880, 0.6931472
    %v882 = vlog2.pop %v863
    %v883 = vmul.f32 %v882, 0.6931472
    %v884 = vlog2.pop %v864
    %v885 = vmul.f32 %v884, 0.6931472
    %v886 = vlog2.pop %v865
    %v887 = vmul.f32 %v886, 0.6931472
    %v888 = vlog2.pop %v866
    %v889 = vmul.f32 %v888, 0.6931472
    %v890 = vlog2.pop %v867
    %v891 = vmul.f32 %v890, 0.6931472
    %v892 = vlog2.pop %v868
    %v893 = vmul.f32 %v892, 0.6931472
    %v894 = vlog2.pop %v869
    %v895 = vmul.f32 %v894, 0.6931472
    %v896 = vlog2.pop %v870
    %v897 = vmul.f32 %v896, 0.6931472
    %v898 = vlog2.pop %v871
    %v899 = vmul.f32 %v898, 0.6931472
    %v900 = vlog2.pop %v872
    %v901 = vmul.f32 %v900, 0.6931472
    %v902 = vlog2.pop %v873
    %v903 = vmul.f32 %v902, 0.6931472
    %v904 = vlog2.pop %v874
    %v905 = vmul.f32 %v904, 0.6931472
    %v906 = vlog2.pop %v875
    %v907 = vmul.f32 %v906, 0.6931472
    %v908 = vsel %vm796, %v421, %v877
    %v909 = vsel %vm797, %v532, %v879
    %v910 = vsel %vm798, %v427, %v881
    %v911 = vsel %vm799, %v538, %v883
    %v912 = vsel %vm800, %v433, %v885
    %v913 = vsel %vm801, %v544, %v887
    %v914 = vsel %vm802, %v439, %v889
    %v915 = vsel %vm803, %v550, %v891
    %v916 = vsel %vm804, %v445, %v893
    %v917 = vsel %vm805, %v556, %v895
    %v918 = vsel %vm806, %v451, %v897
    %v919 = vsel %vm807, %v562, %v899
    %v920 = vsel %vm808, %v457, %v901
    %v921 = vsel %vm809, %v568, %v903
    %v922 = vsel %vm810, %v463, %v905
    %v923 = vsel %vm811, %v574, %v907
    %v925 = vlaneseq
    %v926 = vshrl.u32 %v925, 7
    %v927 = vsub.s32 0, %v926
    %v928 = vrot.slane %v131, %v927
    %v929 = vlaneseq
    %v930 = vshrl.u32 %v929, 7
    %v931 = vsub.s32 1, %v930
    %v932 = vrot.slane %v131, %v931
    %v935 = vmul.f32 %v908, %v928
    %v936 = vmul.f32 %v909, %v932
    %v937 = vmul.f32 %v910, %v928
    %v938 = vmul.f32 %v911, %v932
    %v939 = vmul.f32 %v912, %v928
    %v940 = vmul.f32 %v913, %v932
    %v941 = vmul.f32 %v914, %v928
    %v942 = vmul.f32 %v915, %v932
    %v943 = vmul.f32 %v916, %v928
    %v944 = vmul.f32 %v917, %v932
    %v945 = vmul.f32 %v918, %v928
    %v946 = vmul.f32 %v919, %v932
    %v947 = vmul.f32 %v920, %v928
    %v948 = vmul.f32 %v921, %v932
    %v949 = vmul.f32 %v922, %v928
    %v950 = vmul.f32 %v923, %v932
    %v951 = vmul.f32 %v935, 1.442695
    %v952 = vpow.pop %v951
    %v953 = vmul.f32 %v936, 1.442695
    %v954 = vpow.pop %v953
    %v955 = vmul.f32 %v937, 1.442695
    %v956 = vpow.pop %v955
    %v957 = vmul.f32 %v938, 1.442695
    %v958 = vpow.pop %v957
    %v959 = vmul.f32 %v939, 1.442695
    %v960 = vpow.pop %v959
    %v961 = vmul.f32 %v940, 1.442695
    %v962 = vpow.pop %v961
    %v963 = vmul.f32 %v941, 1.442695
    %v964 = vpow.pop %v963
    %v965 = vmul.f32 %v942, 1.442695
    %v966 = vpow.pop %v965
    %v967 = vmul.f32 %v943, 1.442695
    %v968 = vpow.pop %v967
    %v969 = vmul.f32 %v944, 1.442695
    %v970 = vpow.pop %v969
    %v971 = vmul.f32 %v945, 1.442695
    %v972 = vpow.pop %v971
    %v973 = vmul.f32 %v946, 1.442695
    %v974 = vpow.pop %v973
    %v975 = vmul.f32 %v947, 1.442695
    %v976 = vpow.pop %v975
    %v977 = vmul.f32 %v948, 1.442695
    %v978 = vpow.pop %v977
    %v979 = vmul.f32 %v949, 1.442695
    %v980 = vpow.pop %v979
    %v981 = vmul.f32 %v950, 1.442695
    %v982 = vpow.pop %v981
    %v983 = vmul.f32 %v908, %v308
    %v984 = vmul.f32 %v909, %v419
    %v985 = vmul.f32 %v910, %v314
    %v986 = vmul.f32 %v911, %v425
    %v987 = vmul.f32 %v912, %v320
    %v988 = vmul.f32 %v913, %v431
    %v989 = vmul.f32 %v914, %v326
    %v990 = vmul.f32 %v915, %v437
    %v991 = vmul.f32 %v916, %v332
    %v992 = vmul.f32 %v917, %v443
    %v993 = vmul.f32 %v918, %v338
    %v994 = vmul.f32 %v919, %v449
    %v995 = vmul.f32 %v920, %v344
    %v996 = vmul.f32 %v921, %v455
    %v997 = vmul.f32 %v922, %v350
    %v998 = vmul.f32 %v923, %v461
    %v999 = vmul.f32 %v983, %v534
    %v1000 = vmul.f32 %v984, %v645
    %v1001 = vmul.f32 %v985, %v540
    %v1002 = vmul.f32 %v986, %v651
    %v1003 = vmul.f32 %v987, %v546
    %v1004 = vmul.f32 %v988, %v657
    %v1005 = vmul.f32 %v989, %v552
    %v1006 = vmul.f32 %v990, %v663
    %v1007 = vmul.f32 %v991, %v558
    %v1008 = vmul.f32 %v992, %v669
    %v1009 = vmul.f32 %v993, %v564
    %v1010 = vmul.f32 %v994, %v675
    %v1011 = vmul.f32 %v995, %v570
    %v1012 = vmul.f32 %v996, %v681
    %v1013 = vmul.f32 %v997, %v576
    %v1014 = vmul.f32 %v998, %v687
    %v1015 = vmul.f32 %v952, 0.0
    %v1016 = vmul.f32 %v954, 0.0
    %v1017 = vadd.f32 %v1015, %v999
    %v1018 = vadd.f32 %v1016, %v1000
    %1019 = vst [vmem:[#allocation2] sm:$0xff] %v1017
    %1020 = vst [vmem:[#allocation2 + $0x8] sm:$0xff] %v1018
    %v1021 = vmul.f32 %v956, %v1017
    %v1022 = vmul.f32 %v958, %v1018
    %v1023 = vadd.f32 %v1021, %v1001
    %v1024 = vadd.f32 %v1022, %v1002
    %s1025 = scalar_lea.vmem [#allocation2], 16
    %1026 = vst [vmem:[%s1025] sm:$0xff] %v1023
    %1027 = vst [vmem:[%s1025 + $0x8] sm:$0xff] %v1024
    %v1028 = vmul.f32 %v960, %v1023
    %v1029 = vmul.f32 %v962, %v1024
    %v1030 = vadd.f32 %v1028, %v1003
    %v1031 = vadd.f32 %v1029, %v1004
    %s1032 = scalar_lea.vmem [#allocation2], 32
    %1033 = vst [vmem:[%s1032] sm:$0xff] %v1030
    %1034 = vst [vmem:[%s1032 + $0x8] sm:$0xff] %v1031
    %v1035 = vmul.f32 %v964, %v1030
    %v1036 = vmul.f32 %v966, %v1031
    %v1037 = vadd.f32 %v1035, %v1005
    %v1038 = vadd.f32 %v1036, %v1006
    %s1039 = scalar_lea.vmem [#allocation2], 48
    %1040 = vst [vmem:[%s1039] sm:$0xff] %v1037
    %1041 = vst [vmem:[%s1039 + $0x8] sm:$0xff] %v1038
    %v1042 = vmul.f32 %v968, %v1037
    %v1043 = vmul.f32 %v970, %v1038
    %v1044 = vadd.f32 %v1042, %v1007
    %v1045 = vadd.f32 %v1043, %v1008
    %s1046 = scalar_lea.vmem [#allocation2], 64
    %1047 = vst [vmem:[%s1046] sm:$0xff] %v1044
    %1048 = vst [vmem:[%s1046 + $0x8] sm:$0xff] %v1045
    %v1049 = vmul.f32 %v972, %v1044
    %v1050 = vmul.f32 %v974, %v1045
    %v1051 = vadd.f32 %v1049, %v1009
    %v1052 = vadd.f32 %v1050, %v1010
    %s1053 = scalar_lea.vmem [#allocation2], 80
    %1054 = vst [vmem:[%s1053] sm:$0xff] %v1051
    %1055 = vst [vmem:[%s1053 + $0x8] sm:$0xff] %v1052
    %v1056 = vmul.f32 %v976, %v1051
    %v1057 = vmul.f32 %v978, %v1052
    %v1058 = vadd.f32 %v1056, %v1011
    %v1059 = vadd.f32 %v1057, %v1012
    %s1060 = scalar_lea.vmem [#allocation2], 96
    %1061 = vst [vmem:[%s1060] sm:$0xff] %v1058
    %1062 = vst [vmem:[%s1060 + $0x8] sm:$0xff] %v1059
    %v1063 = vmul.f32 %v980, %v1058
    %v1064 = vmul.f32 %v982, %v1059
    %v1065 = vadd.f32 %v1063, %v1013
    %v1066 = vadd.f32 %v1064, %v1014
    %s1067 = scalar_lea.vmem [#allocation2], 112
    %1068 = vst [vmem:[%s1067] sm:$0xff] %v1065
    %1069 = vst [vmem:[%s1067 + $0x8] sm:$0xff] %v1066
    %v1070 = vld [vmem:[#allocation2] sm:$0xff]
    %v1071 = vld [vmem:[#allocation2 + $0x8] sm:$0xff]
    %v1072 = vld [vmem:[#allocation2 + $0x10] sm:$0xff]
    %v1073 = vld [vmem:[#allocation2 + $0x18] sm:$0xff]
    %v1074 = vld [vmem:[#allocation2 + $0x20] sm:$0xff]
    %v1075 = vld [vmem:[#allocation2 + $0x28] sm:$0xff]
    %v1076 = vld [vmem:[#allocation2 + $0x30] sm:$0xff]
    %v1077 = vld [vmem:[#allocation2 + $0x38] sm:$0xff]
    %v1078 = vld [vmem:[#allocation2 + $0x40] sm:$0xff]
    %v1079 = vld [vmem:[#allocation2 + $0x48] sm:$0xff]
    %v1080 = vld [vmem:[#allocation2 + $0x50] sm:$0xff]
    %v1081 = vld [vmem:[#allocation2 + $0x58] sm:$0xff]
    %v1082 = vld [vmem:[#allocation2 + $0x60] sm:$0xff]
    %v1083 = vld [vmem:[#allocation2 + $0x68] sm:$0xff]
    %v1084 = vld [vmem:[#allocation2 + $0x70] sm:$0xff]
    %v1085 = vld [vmem:[#allocation2 + $0x78] sm:$0xff]
    %v1086 = vmul.f32 %v1070, %v647
    %v1087 = vmul.f32 %v1071, %v758
    %v1088 = vmul.f32 %v1072, %v653
    %v1089 = vmul.f32 %v1073, %v763
    %v1090 = vmul.f32 %v1074, %v659
    %v1091 = vmul.f32 %v1075, %v768
    %v1092 = vmul.f32 %v1076, %v665
    %v1093 = vmul.f32 %v1077, %v773
    %v1094 = vmul.f32 %v1078, %v671
    %v1095 = vmul.f32 %v1079, %v778
    %v1096 = vmul.f32 %v1080, %v677
    %v1097 = vmul.f32 %v1081, %v783
    %v1098 = vmul.f32 %v1082, %v683
    %v1099 = vmul.f32 %v1083, %v788
    %v1100 = vmul.f32 %v1084, %v689
    %v1101 = vmul.f32 %v1085, %v793
    %v1102 = vadd.f32 %v1086, %v1087
    %v1103 = vadd.f32 %v1088, %v1089
    %v1104 = vadd.f32 %v1090, %v1091
    %v1105 = vadd.f32 %v1092, %v1093
    %v1106 = vadd.f32 %v1094, %v1095
    %v1107 = vadd.f32 %v1096, %v1097
    %v1108 = vadd.f32 %v1098, %v1099
    %v1109 = vadd.f32 %v1100, %v1101
    %1118 = vrot.lane.b32.xlu0 %v1102, 64
    %v1119 = vpop.permute.xlu0 %1118
    %1120 = vrot.lane.b32.xlu0 %v1103, 64
    %v1121 = vpop.permute.xlu0 %1120
    %1122 = vrot.lane.b32.xlu0 %v1104, 64
    %v1123 = vpop.permute.xlu0 %1122
    %1124 = vrot.lane.b32.xlu0 %v1105, 64
    %v1125 = vpop.permute.xlu0 %1124
    %1126 = vrot.lane.b32.xlu0 %v1106, 64
    %v1127 = vpop.permute.xlu0 %1126
    %1128 = vrot.lane.b32.xlu0 %v1107, 64
    %v1129 = vpop.permute.xlu0 %1128
    %1130 = vrot.lane.b32.xlu0 %v1108, 64
    %v1131 = vpop.permute.xlu0 %1130
    %1132 = vrot.lane.b32.xlu0 %v1109, 64
    %v1133 = vpop.permute.xlu0 %1132
    %v1142 = vadd.f32 %v1102, %v1119
    %v1143 = vadd.f32 %v1103, %v1121
    %v1144 = vadd.f32 %v1104, %v1123
    %v1145 = vadd.f32 %v1105, %v1125
    %v1146 = vadd.f32 %v1106, %v1127
    %v1147 = vadd.f32 %v1107, %v1129
    %v1148 = vadd.f32 %v1108, %v1131
    %v1149 = vadd.f32 %v1109, %v1133
    %1158 = vrot.lane.b32.xlu0 %v1142, 96
    %v1159 = vpop.permute.xlu0 %1158
    %1160 = vrot.lane.b32.xlu0 %v1143, 96
    %v1161 = vpop.permute.xlu0 %1160
    %1162 = vrot.lane.b32.xlu0 %v1144, 96
    %v1163 = vpop.permute.xlu0 %1162
    %1164 = vrot.lane.b32.xlu0 %v1145, 96
    %v1165 = vpop.permute.xlu0 %1164
    %1166 = vrot.lane.b32.xlu0 %v1146, 96
    %v1167 = vpop.permute.xlu0 %1166
    %1168 = vrot.lane.b32.xlu0 %v1147, 96
    %v1169 = vpop.permute.xlu0 %1168
    %1170 = vrot.lane.b32.xlu0 %v1148, 96
    %v1171 = vpop.permute.xlu0 %1170
    %1172 = vrot.lane.b32.xlu0 %v1149, 96
    %v1173 = vpop.permute.xlu0 %1172
    %v1182 = vadd.f32 %v1142, %v1159
    %v1183 = vadd.f32 %v1143, %v1161
    %v1184 = vadd.f32 %v1144, %v1163
    %v1185 = vadd.f32 %v1145, %v1165
    %v1186 = vadd.f32 %v1146, %v1167
    %v1187 = vadd.f32 %v1147, %v1169
    %v1188 = vadd.f32 %v1148, %v1171
    %v1189 = vadd.f32 %v1149, %v1173
    %1198 = vrot.lane.b32.xlu0 %v306, 96
    %v1199 = vpop.permute.xlu0 %1198
    %1200 = vrot.lane.b32.xlu0 %v312, 96
    %v1201 = vpop.permute.xlu0 %1200
    %1202 = vrot.lane.b32.xlu0 %v318, 96
    %v1203 = vpop.permute.xlu0 %1202
    %1204 = vrot.lane.b32.xlu0 %v324, 96
    %v1205 = vpop.permute.xlu0 %1204
    %1206 = vrot.lane.b32.xlu0 %v330, 96
    %v1207 = vpop.permute.xlu0 %1206
    %1208 = vrot.lane.b32.xlu0 %v336, 96
    %v1209 = vpop.permute.xlu0 %1208
    %1210 = vrot.lane.b32.xlu0 %v342, 96
    %v1211 = vpop.permute.xlu0 %1210
    %1212 = vrot.lane.b32.xlu0 %v348, 96
    %v1213 = vpop.permute.xlu0 %1212
    %v1222 = vadd.f32 %v1182, %v1199
    %v1223 = vadd.f32 %v1183, %v1201
    %v1224 = vadd.f32 %v1184, %v1203
    %v1225 = vadd.f32 %v1185, %v1205
    %v1226 = vadd.f32 %v1186, %v1207
    %v1227 = vadd.f32 %v1187, %v1209
    %v1228 = vadd.f32 %v1188, %v1211
    %v1229 = vadd.f32 %v1189, %v1213
    %v1230 = vsub.f32 0.0, %v306
    %v1231 = vsub.f32 0.0, %v312
    %v1232 = vsub.f32 0.0, %v318
    %v1233 = vsub.f32 0.0, %v324
    %v1234 = vsub.f32 0.0, %v330
    %v1235 = vsub.f32 0.0, %v336
    %v1236 = vsub.f32 0.0, %v342
    %v1237 = vsub.f32 0.0, %v348
    %v1238 = vmul.f32 %v1230, 1.442695
    %v1239 = vpow.pop %v1238
    %v1240 = vmul.f32 %v1231, 1.442695
    %v1241 = vpow.pop %v1240
    %v1242 = vmul.f32 %v1232, 1.442695
    %v1243 = vpow.pop %v1242
    %v1244 = vmul.f32 %v1233, 1.442695
    %v1245 = vpow.pop %v1244
    %v1246 = vmul.f32 %v1234, 1.442695
    %v1247 = vpow.pop %v1246
    %v1248 = vmul.f32 %v1235, 1.442695
    %v1249 = vpow.pop %v1248
    %v1250 = vmul.f32 %v1236, 1.442695
    %v1251 = vpow.pop %v1250
    %v1252 = vmul.f32 %v1237, 1.442695
    %v1253 = vpow.pop %v1252
    %v1254 = vadd.f32 %v1239, 1.0
    %v1255 = vadd.f32 %v1241, 1.0
    %v1256 = vadd.f32 %v1243, 1.0
    %v1257 = vadd.f32 %v1245, 1.0
    %v1258 = vadd.f32 %v1247, 1.0
    %v1259 = vadd.f32 %v1249, 1.0
    %v1260 = vadd.f32 %v1251, 1.0
    %v1261 = vadd.f32 %v1253, 1.0
    %v1262 = vrcp.pop %v1254
    %v1263 = vmul.f32 1.0, %v1262
    %v1264 = vrcp.pop %v1255
    %v1265 = vmul.f32 1.0, %v1264
    %v1266 = vrcp.pop %v1256
    %v1267 = vmul.f32 1.0, %v1266
    %v1268 = vrcp.pop %v1257
    %v1269 = vmul.f32 1.0, %v1268
    %v1270 = vrcp.pop %v1258
    %v1271 = vmul.f32 1.0, %v1270
    %v1272 = vrcp.pop %v1259
    %v1273 = vmul.f32 1.0, %v1272
    %v1274 = vrcp.pop %v1260
    %v1275 = vmul.f32 1.0, %v1274
    %v1276 = vrcp.pop %v1261
    %v1277 = vmul.f32 1.0, %v1276
    %v1278 = vmul.f32 %v306, %v1263
    %v1279 = vmul.f32 %v312, %v1265
    %v1280 = vmul.f32 %v318, %v1267
    %v1281 = vmul.f32 %v324, %v1269
    %v1282 = vmul.f32 %v330, %v1271
    %v1283 = vmul.f32 %v336, %v1273
    %v1284 = vmul.f32 %v342, %v1275
    %v1285 = vmul.f32 %v348, %v1277
    %v1294 = vrot.slane %v1278, 2
    %v1295 = vrot.slane %v1279, 2
    %v1296 = vrot.slane %v1280, 2
    %v1297 = vrot.slane %v1281, 2
    %v1298 = vrot.slane %v1282, 2
    %v1299 = vrot.slane %v1283, 2
    %v1300 = vrot.slane %v1284, 2
    %v1301 = vrot.slane %v1285, 2
    %v1310 = vadd.f32 %v1278, %v1294
    %v1311 = vadd.f32 %v1279, %v1295
    %v1312 = vadd.f32 %v1280, %v1296
    %v1313 = vadd.f32 %v1281, %v1297
    %v1314 = vadd.f32 %v1282, %v1298
    %v1315 = vadd.f32 %v1283, %v1299
    %v1316 = vadd.f32 %v1284, %v1300
    %v1317 = vadd.f32 %v1285, %v1301
    %v1326 = vrot.slane %v1310, 2
    %v1327 = vrot.slane %v1311, 2
    %v1328 = vrot.slane %v1312, 2
    %v1329 = vrot.slane %v1313, 2
    %v1330 = vrot.slane %v1314, 2
    %v1331 = vrot.slane %v1315, 2
    %v1332 = vrot.slane %v1316, 2
    %v1333 = vrot.slane %v1317, 2
    %v1342 = vmul.f32 %v1222, %v1326
    %v1343 = vmul.f32 %v1223, %v1327
    %v1344 = vmul.f32 %v1224, %v1328
    %v1345 = vmul.f32 %v1225, %v1329
    %v1346 = vmul.f32 %v1226, %v1330
    %v1347 = vmul.f32 %v1227, %v1331
    %v1348 = vmul.f32 %v1228, %v1332
    %v1349 = vmul.f32 %v1229, %v1333
    %v1350 = vrot.slane %v1278, 4
    %v1351 = vrot.slane %v1279, 4
    %v1352 = vrot.slane %v1280, 4
    %v1353 = vrot.slane %v1281, 4
    %v1354 = vrot.slane %v1282, 4
    %v1355 = vrot.slane %v1283, 4
    %v1356 = vrot.slane %v1284, 4
    %v1357 = vrot.slane %v1285, 4
    %v1366 = vadd.f32 %v1278, %v1350
    %v1367 = vadd.f32 %v1279, %v1351
    %v1368 = vadd.f32 %v1280, %v1352
    %v1369 = vadd.f32 %v1281, %v1353
    %v1370 = vadd.f32 %v1282, %v1354
    %v1371 = vadd.f32 %v1283, %v1355
    %v1372 = vadd.f32 %v1284, %v1356
    %v1373 = vadd.f32 %v1285, %v1357
    %v1382 = vrot.slane %v1366, 6
    %v1383 = vrot.slane %v1367, 6
    %v1384 = vrot.slane %v1368, 6
    %v1385 = vrot.slane %v1369, 6
    %v1386 = vrot.slane %v1370, 6
    %v1387 = vrot.slane %v1371, 6
    %v1388 = vrot.slane %v1372, 6
    %v1389 = vrot.slane %v1373, 6
    %v1398 = vmul.f32 %v1222, %v1382
    %v1399 = vmul.f32 %v1223, %v1383
    %v1400 = vmul.f32 %v1224, %v1384
    %v1401 = vmul.f32 %v1225, %v1385
    %v1402 = vmul.f32 %v1226, %v1386
    %v1403 = vmul.f32 %v1227, %v1387
    %v1404 = vmul.f32 %v1228, %v1388
    %v1405 = vmul.f32 %v1229, %v1389
    %v1414 = vrot.slane %v1398, 2
    %v1415 = vrot.slane %v1399, 2
    %v1416 = vrot.slane %v1400, 2
    %v1417 = vrot.slane %v1401, 2
    %v1418 = vrot.slane %v1402, 2
    %v1419 = vrot.slane %v1403, 2
    %v1420 = vrot.slane %v1404, 2
    %v1421 = vrot.slane %v1405, 2
    %v1430 = vadd.f32 %v1342, %v1414
    %v1431 = vadd.f32 %v1343, %v1415
    %v1432 = vadd.f32 %v1344, %v1416
    %v1433 = vadd.f32 %v1345, %v1417
    %v1434 = vadd.f32 %v1346, %v1418
    %v1435 = vadd.f32 %v1347, %v1419
    %v1436 = vadd.f32 %v1348, %v1420
    %v1437 = vadd.f32 %v1349, %v1421
    %v1438 = vmul.f32 %v1222, 2.0
    %v1439 = vmul.f32 %v1223, 2.0
    %v1440 = vmul.f32 %v1224, 2.0
    %v1441 = vmul.f32 %v1225, 2.0
    %v1442 = vmul.f32 %v1226, 2.0
    %v1443 = vmul.f32 %v1227, 2.0
    %v1444 = vmul.f32 %v1228, 2.0
    %v1445 = vmul.f32 %v1229, 2.0
    %v1446 = vmul.f32 %v1438, %v1350
    %v1447 = vmul.f32 %v1439, %v1351
    %v1448 = vmul.f32 %v1440, %v1352
    %v1449 = vmul.f32 %v1441, %v1353
    %v1450 = vmul.f32 %v1442, %v1354
    %v1451 = vmul.f32 %v1443, %v1355
    %v1452 = vmul.f32 %v1444, %v1356
    %v1453 = vmul.f32 %v1445, %v1357
    %v1462 = vrot.slane %v1446, 4
    %v1463 = vrot.slane %v1447, 4
    %v1464 = vrot.slane %v1448, 4
    %v1465 = vrot.slane %v1449, 4
    %v1466 = vrot.slane %v1450, 4
    %v1467 = vrot.slane %v1451, 4
    %v1468 = vrot.slane %v1452, 4
    %v1469 = vrot.slane %v1453, 4
    %v1478 = vadd.f32 %v1430, %v1462
    %v1479 = vadd.f32 %v1431, %v1463
    %v1480 = vadd.f32 %v1432, %v1464
    %v1481 = vadd.f32 %v1433, %v1465
    %v1482 = vadd.f32 %v1434, %v1466
    %v1483 = vadd.f32 %v1435, %v1467
    %v1484 = vadd.f32 %v1436, %v1468
    %v1485 = vadd.f32 %v1437, %v1469
    %v1494 = vrot.slane %v1479, 7
    %vm1495 = vcmask 1041409
    %v1496 = vsel %vm1495, %v1494, %v1478
    %v1497 = vrot.slane %v1480, 6
    %vm1498 = vcmask 1042434
    %v1499 = vsel %vm1498, %v1497, %v1496
    %v1500 = vrot.slane %v1481, 5
    %vm1501 = vcmask 1043459
    %v1502 = vsel %vm1501, %v1500, %v1499
    %v1503 = vrot.slane %v1482, 4
    %vm1504 = vcmask 1044484
    %v1505 = vsel %vm1504, %v1503, %v1502
    %v1506 = vrot.slane %v1483, 3
    %vm1507 = vcmask 1045509
    %v1508 = vsel %vm1507, %v1506, %v1505
    %v1509 = vrot.slane %v1484, 2
    %vm1510 = vcmask 1046534
    %v1511 = vsel %vm1510, %v1509, %v1508
    %v1512 = vrot.slane %v1485, 1
    %vm1513 = vcmask 1047559
    %v1514 = vsel %vm1513, %v1512, %v1511
    %1516 = vst.msk [vmem:[#allocation3] sm:$0xff] %vm23, %v1514
    %v1517 = vsel %vm1498, %v1494, %v1478
    %v1518 = vsel %vm1501, %v1497, %v1517
    %v1519 = vsel %vm1504, %v1500, %v1518
    %v1520 = vsel %vm1507, %v1503, %v1519
    %v1521 = vsel %vm1510, %v1506, %v1520
    %v1522 = vsel %vm1513, %v1509, %v1521
    %s1525 = scalar_lea.vmem [#allocation3], 8
    %vm1526 = vcmask 261121
    %1527 = vst.msk [vmem:[%s1525 - $0x1] sm:$0xfe] %vm1526, %v1522
    %vm1528 = vcmask 253952
    %1529 = vst.msk [vmem:[%s1525 + $0x7] sm:$0x1] %vm1528, %v1512
    // Predicated region
    $region14: #{vim_block3_pallas.1} parent=1 // pred_check
      _
    $region15: #{vim_block3_pallas.1} parent=1 // pred_check_branch
      %1531 = sbr.rel (0) target = $region17
    $region16: #{vim_block3_pallas.1} parent=1 // pred_region
      %s1533 = ssub.s32 256, 256
      %1534 = vsyncadd [#allocation4], %s1533
      %s1535 = sshll.u32 [#allocation3], 4
      %s1536 = int_to_ptr.vmem [resolvable:$true] %s1535
      %1541 = dma.vmem_to_hbm [thread:$0]  %s1536, 256, %s3, [#allocation4], 128, 128, 8
    $region17: #{vim_block3_pallas.1} parent=1 // pred_fallthru
      _
    // Predicated region
    $region18: #{vim_block3_pallas.1} parent=1 // pred_check
      _
    $region19: #{vim_block3_pallas.1} parent=1 // pred_check_branch
      %1543 = sbr.rel (0) target = $region21
    $region20: #{vim_block3_pallas.1} parent=1 // pred_region
      %1544 = dma.done [#allocation4], 256
    $region21: #{vim_block3_pallas.1} parent=1 // pred_fallthru
      _
    %1545 = vsyncpa [#allocation4], 1

</llo_original>
